<compile_context>
chip_gen: v5e
topology: v5e:2x2
jax: 0.10.0
libtpu: 0.0.40
codegen_flags: <defaults>
</compile_context>

<pallas_src>
import functools

import jax
import jax.numpy as jnp
from jax.experimental import pallas as pl
from jax.experimental.pallas import tpu as pltpu


def _round_up(x, m):
    return ((x + m - 1) // m) * m


def _shift_list(D):
    """Circular column shifts (in units of D) needed to cover all unordered
    (i, j) row pairs of the symmetric tensor product exactly once."""
    return tuple(range(0, D // 2 + 1))


def _fold_w1(w1, D):
    """Fold the symmetry of tp = x3 @ x3^T into the first-layer weights.

    Returns W of shape (S, D*D, H) such that
        tp_flat @ w1 == sum_s (x ⊙ roll_s(x)) @ W[s]
    where roll_s(x)[:, D*i + k] = x3[:, (i + s) % D, k]  (a circular lane
    shift of x by s*D columns).
    """
    DD, H = w1.shape
    w13 = w1.reshape(D, D, H)
    ii = jnp.arange(D)
    mats = []
    for s in _shift_list(D):
        jj = (ii + s) % D
        coeff = w13[ii, jj, :]                          # (D, H): w1[i*D + j]
        if s != 0 and not (D % 2 == 0 and s == D // 2):
            coeff = coeff + w13[jj, ii, :]              # fold symmetric partner
        mats.append(jnp.repeat(coeff, D, axis=0))       # row D*i+k -> coeff[i]
    return jnp.stack(mats, axis=0)                      # (S, D*D, H)


def _so3_tp_kernel(x_ref, w1f_ref, b1_ref, w2_ref, b2_ref, o_ref, *, D):
    """One edge tile, natural edge-major layout (edges on sublanes, the D*D
    matrix entries on lanes).

    x_ref  : (TE, D*D)     streamed
    w1f_ref: (S, D*D, H)   folded first-layer weights, resident
    b1_ref : (1, H)        resident
    w2_ref : (H, O)        resident
    b2_ref : (1, O)        resident
    o_ref  : (TE, O)
    """
    x = x_ref[...].astype(jnp.float32)                       # (TE, DD)

    acc = None
    for idx, s in enumerate(_shift_list(D)):
        if s == 0:
            x_s = x
        else:
            c = s * D                                         # circular lane shift
            x_s = jnp.concatenate([x[:, c:], x[:, :c]], axis=1)
        p = x * x_s                                           # (TE, DD), VPU
        d = jnp.dot(p, w1f_ref[idx],                          # k-sum on the MXU
                    preferred_element_type=jnp.float32)
        acc = d if acc is None else acc + d

    h = jnp.maximum(acc + b1_ref[...], 0.0)                   # (TE, H)
    out = jnp.dot(h, w2_ref[...],
                  preferred_element_type=jnp.float32) + b2_ref[...]
    o_ref[...] = out.astype(o_ref.dtype)                      # natural (E, O) layout


def so3_tensor_product_layer(x_flat, w1, b1, w2, b2, *, input_dim, output_dim,
                             tile_e=2048, compute_dtype=None, out_dtype=None):
    """x_flat: (E, D*D). w1: (D*D, 2*O), b1: (2*O,), w2: (2*O, O), b2: (O,)."""
    E, DD = x_flat.shape
    D = input_dim
    O = output_dim
    H = 2 * output_dim
    assert DD == D * D
    assert w1.shape == (DD, H) and w2.shape == (H, O)
    assert tile_e % 8 == 0, "tile_e must be a multiple of 8 (sublanes)"

    orig_dtype = x_flat.dtype
    if out_dtype is None:
        out_dtype = orig_dtype
    if compute_dtype is not None and x_flat.dtype != compute_dtype:
        # NOTE: this cast is an extra HBM pass; in a full EGNN pipeline the
        # producer should emit x in `compute_dtype` directly.
        x_flat = x_flat.astype(compute_dtype)

    # Tile sizing: clamp to E; prefer >= 2 tiles when E is large enough so
    # both v7x TensorCores get edge tiles (grid axis is "parallel").
    max_tile = _round_up(E, 8)
    if tile_e >= E and E >= 512:
        tile_e = _round_up((E + 1) // 2, 8)
    tile_e = max(8, min(tile_e, max_tile))
    num_tiles = (E + tile_e - 1) // tile_e

    shifts = _shift_list(D)
    w1f = _fold_w1(jnp.asarray(w1, jnp.float32), D)           # (S, DD, H)
    b1c = jnp.asarray(b1, jnp.float32).reshape(1, H)
    w2c = jnp.asarray(w2, jnp.float32)
    b2c = jnp.asarray(b2, jnp.float32).reshape(1, O)

    kernel = functools.partial(_so3_tp_kernel, D=D)

    return pl.pallas_call(
        kernel,
        out_shape=jax.ShapeDtypeStruct((E, O), out_dtype),
        grid_spec=pltpu.PrefetchScalarGridSpec(
            num_scalar_prefetch=0,
            grid=(num_tiles,),
            in_specs=[
                pl.BlockSpec((tile_e, DD), lambda e: (e, 0)),             # streamed
                pl.BlockSpec((len(shifts), DD, H), lambda e: (0, 0, 0)),  # resident
                pl.BlockSpec((1, H), lambda e: (0, 0)),                   # resident
                pl.BlockSpec((H, O), lambda e: (0, 0)),                   # resident
                pl.BlockSpec((1, O), lambda e: (0, 0)),                   # resident
            ],
            out_specs=pl.BlockSpec((tile_e, O), lambda e: (e, 0)),
        ),
        compiler_params=pltpu.CompilerParams(
            dimension_semantics=("parallel",),                 # megacore shard
            vmem_limit_bytes=32 * 1024 * 1024,
        ),
    )(x_flat, w1f, b1c, w2c, b2c)


def init_params(key, input_dim, output_dim):
    """PyTorch nn.Linear default init: U(-1/sqrt(fan_in), 1/sqrt(fan_in)).
    Weights stored as (in_features, out_features)."""
    D2 = input_dim * input_dim
    H = 2 * output_dim
    O = output_dim
    k1, k2, k3, k4 = jax.random.split(key, 4)
    bnd1 = 1.0 / jnp.sqrt(D2)
    bnd2 = 1.0 / jnp.sqrt(H)
    w1 = jax.random.uniform(k1, (D2, H), jnp.float32, -bnd1, bnd1)
    b1 = jax.random.uniform(k2, (H,), jnp.float32, -bnd1, bnd1)
    w2 = jax.random.uniform(k3, (H, O), jnp.float32, -bnd2, bnd2)
    b2 = jax.random.uniform(k4, (O,), jnp.float32, -bnd2, bnd2)
    return w1, b1, w2, b2


def reference_forward(x_flat, w1, b1, w2, b2, input_dim):
    E = x_flat.shape[0]
    D = input_dim
    hi = jax.lax.Precision.HIGHEST
    x3 = x_flat.reshape(E, D, D)
    tp = jnp.einsum("eik,ejk->eij", x3, x3, precision=hi)
    tp_flat = tp.reshape(E, D * D)
    h = jnp.maximum(jnp.dot(tp_flat, w1, precision=hi) + b1, 0.0)
    return jnp.dot(h, w2, precision=hi) + b2


if __name__ == "__main__":
    input_dim = 3        # module uses SO3TensorProductLayer(input_dim=3, ...)
    output_dim = 32      # hidden_nf
    num_edges = 1000     # not a multiple of the tile -> exercises partial tiles

    key = jax.random.PRNGKey(0)
    kx, kp = jax.random.split(key)
    x = jax.random.normal(kx, (num_edges, input_dim * input_dim), jnp.float32)
    w1, b1, w2, b2 = init_params(kp, input_dim, output_dim)

    ref = reference_forward(x, w1, b1, w2, b2, input_dim)

    # f32 run; small tile so the demo exercises a multi-step grid plus a
    # partial boundary tile (1000 = 3*256 + 232).
    out = so3_tensor_product_layer(
        x, w1, b1, w2, b2, input_dim=input_dim, output_dim=output_dim,
        tile_e=256)
    out = jax.block_until_ready(out)
    assert out.shape == (num_edges, output_dim)
    assert jnp.allclose(out, ref, atol=1e-4, rtol=1e-4), "f32 mismatch vs ref"

    # Default (large-tile) path: auto-splits into 2 tiles for megacore balance.
    out_big = jax.block_until_ready(so3_tensor_product_layer(
        x, w1, b1, w2, b2, input_dim=input_dim, output_dim=output_dim))
    assert jnp.allclose(out_big, ref, atol=1e-4, rtol=1e-4), "big-tile mismatch"

    # bf16-streamed x (halves streamed input bytes on v6e/v7x); math stays in
    # f32 inside the kernel, so it matches the reference evaluated on
    # bf16-rounded inputs.
    out_bf16 = so3_tensor_product_layer(
        x, w1, b1, w2, b2, input_dim=input_dim, output_dim=output_dim,
        tile_e=256, compute_dtype=jnp.bfloat16)
    out_bf16 = jax.block_until_ready(out_bf16)
    ref_bf16 = reference_forward(
        x.astype(jnp.bfloat16).astype(jnp.float32), w1, b1, w2, b2, input_dim)
    assert jnp.allclose(out_bf16, ref_bf16, atol=1e-3, rtol=1e-3), \
        "bf16 mismatch vs bf16-rounded ref"

    print("KERNEL_OK")
</pallas_src>

<mosaic_0001>
module attributes {stable_mosaic.version = 11 : i64} {
  func.func @_so3_tp_kernel(%arg0: i32, %arg1: memref<256x9xf32, #tpu.memory_space<vmem>>, %arg2: memref<2x9x64xf32, #tpu.memory_space<vmem>>, %arg3: memref<1x64xf32, #tpu.memory_space<vmem>>, %arg4: memref<64x32xf32, #tpu.memory_space<vmem>>, %arg5: memref<1x32xf32, #tpu.memory_space<vmem>>, %arg6: memref<256x32xf32, #tpu.memory_space<vmem>>) attributes {dimension_semantics = [#tpu.dimension_semantics<parallel>], iteration_bounds = array<i64: 4>, scalar_prefetch = 0 : i64, scratch_operands = 0 : i64, tpu.core_type = #tpu.core_type<tc>, window_params = [{transform_indices = @transform_0, window_bounds = array<i64: 256, 9>}, {pipeline_mode = #tpu.pipeline_mode<synchronous>, transform_indices = @transform_1, window_bounds = array<i64: 2, 9, 64>}, {pipeline_mode = #tpu.pipeline_mode<synchronous>, transform_indices = @transform_2, window_bounds = array<i64: 1, 64>}, {pipeline_mode = #tpu.pipeline_mode<synchronous>, transform_indices = @transform_3, window_bounds = array<i64: 64, 32>}, {pipeline_mode = #tpu.pipeline_mode<synchronous>, transform_indices = @transform_4, window_bounds = array<i64: 1, 32>}, {transform_indices = @transform_5, window_bounds = array<i64: 256, 32>}]} {
    %c0 = arith.constant 0 : index
    %c0_0 = arith.constant 0 : index
    %0 = vector.load %arg1[%c0, %c0_0] : memref<256x9xf32, #tpu.memory_space<vmem>>, vector<256x9xf32>
    %1 = arith.mulf %0, %0 : vector<256x9xf32>
    %c0_1 = arith.constant 0 : index
    %c0_2 = arith.constant 0 : index
    %c0_3 = arith.constant 0 : index
    %2 = vector.load %arg2[%c0_1, %c0_2, %c0_3] : memref<2x9x64xf32, #tpu.memory_space<vmem>>, vector<1x9x64xf32>
    %3 = vector.shape_cast %2 : vector<1x9x64xf32> to vector<9x64xf32>
    %cst = arith.constant dense<0.000000e+00> : vector<256x64xf32>
    %4 = tpu.matmul %1, %3, %cst {dimension_numbers = #tpu.dot_dimension_numbers<[1], [0], [0], [1], [0, 0, 1, 1], [], []>} : vector<256x9xf32>, vector<9x64xf32>, vector<256x64xf32> -> vector<256x64xf32>
    %5 = vector.extract_strided_slice %0 {offsets = [0, 3], sizes = [256, 6], strides = [1, 1]} : vector<256x9xf32> to vector<256x6xf32>
    %6 = vector.extract_strided_slice %0 {offsets = [0, 0], sizes = [256, 3], strides = [1, 1]} : vector<256x9xf32> to vector<256x3xf32>
    %7 = tpu.concatenate %5, %6 in 1 : vector<256x6xf32>, vector<256x3xf32> -> vector<256x9xf32>
    %8 = arith.mulf %0, %7 : vector<256x9xf32>
    %c1 = arith.constant 1 : index
    %c0_4 = arith.constant 0 : index
    %c0_5 = arith.constant 0 : index
    %9 = vector.load %arg2[%c1, %c0_4, %c0_5] : memref<2x9x64xf32, #tpu.memory_space<vmem>>, vector<1x9x64xf32>
    %10 = vector.shape_cast %9 : vector<1x9x64xf32> to vector<9x64xf32>
    %cst_6 = arith.constant dense<0.000000e+00> : vector<256x64xf32>
    %11 = tpu.matmul %8, %10, %cst_6 {dimension_numbers = #tpu.dot_dimension_numbers<[1], [0], [0], [1], [0, 0, 1, 1], [], []>} : vector<256x9xf32>, vector<9x64xf32>, vector<256x64xf32> -> vector<256x64xf32>
    %12 = arith.addf %4, %11 : vector<256x64xf32>
    %c0_7 = arith.constant 0 : index
    %c0_8 = arith.constant 0 : index
    %13 = vector.load %arg3[%c0_7, %c0_8] : memref<1x64xf32, #tpu.memory_space<vmem>>, vector<1x64xf32>
    %14 = vector.broadcast %13 : vector<1x64xf32> to vector<256x64xf32>
    %15 = arith.addf %12, %14 : vector<256x64xf32>
    %cst_9 = arith.constant 0.000000e+00 : f32
    %16 = vector.broadcast %cst_9 : f32 to vector<256x64xf32>
    %17 = arith.maximumf %15, %16 : vector<256x64xf32>
    %c0_10 = arith.constant 0 : index
    %c0_11 = arith.constant 0 : index
    %18 = vector.load %arg4[%c0_10, %c0_11] : memref<64x32xf32, #tpu.memory_space<vmem>>, vector<64x32xf32>
    %cst_12 = arith.constant dense<0.000000e+00> : vector<256x32xf32>
    %19 = tpu.matmul %17, %18, %cst_12 {dimension_numbers = #tpu.dot_dimension_numbers<[1], [0], [0], [1], [0, 0, 1, 1], [], []>} : vector<256x64xf32>, vector<64x32xf32>, vector<256x32xf32> -> vector<256x32xf32>
    %c0_13 = arith.constant 0 : index
    %c0_14 = arith.constant 0 : index
    %20 = vector.load %arg5[%c0_13, %c0_14] : memref<1x32xf32, #tpu.memory_space<vmem>>, vector<1x32xf32>
    %21 = vector.broadcast %20 : vector<1x32xf32> to vector<256x32xf32>
    %22 = arith.addf %19, %21 : vector<256x32xf32>
    %c0_15 = arith.constant 0 : index
    %c0_16 = arith.constant 0 : index
    %23 = vector.load %arg6[%c0_15, %c0_16] : memref<256x32xf32, #tpu.memory_space<vmem>>, vector<256x32xf32>
    tpu.vector_store %arg6[%c0_15, %c0_16], %22 {strides = array<i32>} : memref<256x32xf32, #tpu.memory_space<vmem>>, vector<256x32xf32>,
    return
  }
  func.func @transform_0(%arg0: i32) -> (i32, i32) {
    %c0_i32 = arith.constant 0 : i32
    %c0_i32_0 = arith.constant 0 : i32
    return %arg0, %c0_i32 : i32, i32
  }
  func.func @transform_1(%arg0: i32) -> (i32, i32, i32) {
    %c0_i32 = arith.constant 0 : i32
    %c0_i32_0 = arith.constant 0 : i32
    %c0_i32_1 = arith.constant 0 : i32
    %c0_i32_2 = arith.constant 0 : i32
    return %c0_i32, %c0_i32_0, %c0_i32_1 : i32, i32, i32
  }
  func.func @transform_2(%arg0: i32) -> (i32, i32) {
    %c0_i32 = arith.constant 0 : i32
    %c0_i32_0 = arith.constant 0 : i32
    %c0_i32_1 = arith.constant 0 : i32
    return %c0_i32, %c0_i32_0 : i32, i32
  }
  func.func @transform_3(%arg0: i32) -> (i32, i32) {
    %c0_i32 = arith.constant 0 : i32
    %c0_i32_0 = arith.constant 0 : i32
    %c0_i32_1 = arith.constant 0 : i32
    return %c0_i32, %c0_i32_0 : i32, i32
  }
  func.func @transform_4(%arg0: i32) -> (i32, i32) {
    %c0_i32 = arith.constant 0 : i32
    %c0_i32_0 = arith.constant 0 : i32
    %c0_i32_1 = arith.constant 0 : i32
    return %c0_i32, %c0_i32_0 : i32, i32
  }
  func.func @transform_5(%arg0: i32) -> (i32, i32) {
    %c0_i32 = arith.constant 0 : i32
    %c0_i32_0 = arith.constant 0 : i32
    return %arg0, %c0_i32 : i32, i32
  }
}

</mosaic_0001>

<llo_original>
// kernel: tpu_custom_call.1
$region0: #{tpu_custom_call.1}
  #allocation0 [shape = 'u32[]', space=smem, size = 0x4, offset = 0x4, fixed_abs, tag = 'smem constant byte address 0x4 - core index']
  #allocation1 [shape = 'u32[72,128]{1,0:T(1,128)}', space=vmem, size = 0x9000, scoped, tag = 'internal scratch']
  %s0 = inlined_call_operand.vmem [shape: f32[1000,9], index: 0, kind: input, shape index: {}]
  %s1 = inlined_call_operand.vmem [shape: f32[2,9,64], index: 1, kind: input, shape index: {}]
  %s2 = inlined_call_operand.vmem [shape: f32[1,64], index: 2, kind: input, shape index: {}]
  %s3 = inlined_call_operand.vmem [shape: f32[64,32], index: 3, kind: input, shape index: {}]
  %s4 = inlined_call_operand.vmem [shape: f32[1,32], index: 4, kind: input, shape index: {}]
  %s5 = inlined_call_operand.vmem [shape: f32[1000,32], index: 5, kind: output, shape index: {}]
  %s6 = sld [smem:[#allocation0]]
  $region101: #{tpu_custom_call.1} parent=0
    _
  %s8 = ssub.s32 1, %s6
  %s9 = scalar_select 0, %s8, %s6
  $region1: #{tpu_custom_call.1} parent=0
    #allocation2 [shape = 'u8[262144]{0}', space=vmem, size = 0x40000, scoped, tag = 'output window, operand 0']
    loop: start=0, step=1, limit=6
    $region2: #{tpu_custom_call.1} parent=1 // loop_pre_header
      _
    $region3: #{tpu_custom_call.1} parent=1 // loop_header
      %s11 = sphi 0, %s15
      %p12 = scmp.ge.s32.totalorder %s11, 6
      %s21 = sphi 0, %s23
      %s24 = sphi 0, %s21
      %s25 = sphi 0, %s24
      %s41 = sphi 0, %s25
      %s45 = sphi 0, %s45
      %s47 = sphi 0, %s45
      %s48 = sphi 0, %s47
      %s62 = sphi 0, %s48
      %s66 = sphi 0, %s66
      %s68 = sphi 0, %s66
      %s69 = sphi 0, %s68
      %s83 = sphi 0, %s69
      %s87 = sphi 0, %s87
      %s89 = sphi 0, %s87
      %s90 = sphi 0, %s89
      %s104 = sphi 0, %s90
      %s108 = sphi 0, %s108
      %s110 = sphi 0, %s108
      %s111 = sphi 0, %s110
      %s125 = sphi 0, %s111
      %s131 = sphi 0, %s133
      %s134 = sphi 0, %s131
      %s135 = sphi 0, %s134
      %s151 = sphi 0, %s135
    $region4: #{tpu_custom_call.1} parent=1 // loop_header_branch
      %14 = sbr.rel (%p12) target = $region8
    $region5: #{tpu_custom_call.1} parent=1 // loop_body
      %s16 = ssub.s32 %s11, 1
      %s17 = ssub.s32 %s11, 2
      %s18 = sadd.s32 %s11, 1
      %s19 = ssub.s32 %s11, %s18
      %p20 = scmp.eq.s32.totalorder %s19, 0
      %s22 = sadd.s32 %s21, 1
      %s23 = scalar_select %p20, %s21, %s22
      %p26 = pneg %p20
      %p27 = scmp.eq.s32.totalorder %s11, 3
      %p28 = por %p26, %p27
      %p29 = scmp.ne.s32.totalorder %s21, %s24
      %p30 = scmp.eq.s32.totalorder %s11, 0
      %p31 = por %p29, %p30
      %p32 = scmp.ne.s32.totalorder %s21, %s24
      %p33 = scmp.eq.s32.totalorder %s16, 3
      %p34 = por %p32, %p33
      %p35 = scmp.ne.s32.totalorder %s24, %s25
      %p36 = scmp.eq.s32.totalorder %s16, 0
      %p37 = por %p35, %p36
      %p38 = scmp.ne.s32.totalorder %s24, %s25
      %p39 = scmp.eq.s32.totalorder %s17, 3
      %p40 = por %p38, %p39
      %p42 = scmp.ne.s32.totalorder %s25, %s41
      %p43 = scmp.eq.s32.totalorder %s17, 0
      %p44 = por %p42, %p43
      %s46 = sadd.s32 %s45, 1
      %p49 = scmp.eq.s32.totalorder %s11, 3
      %p50 = scmp.ne.s32.totalorder %s45, %s47
      %p51 = scmp.eq.s32.totalorder %s11, 0
      %p52 = por %p50, %p51
      %p53 = scmp.ne.s32.totalorder %s45, %s47
      %p54 = scmp.eq.s32.totalorder %s16, 3
      %p55 = por %p53, %p54
      %p56 = scmp.ne.s32.totalorder %s47, %s48
      %p57 = scmp.eq.s32.totalorder %s16, 0
      %p58 = por %p56, %p57
      %p59 = scmp.ne.s32.totalorder %s47, %s48
      %p60 = scmp.eq.s32.totalorder %s17, 3
      %p61 = por %p59, %p60
      %p63 = scmp.ne.s32.totalorder %s48, %s62
      %p64 = scmp.eq.s32.totalorder %s17, 0
      %p65 = por %p63, %p64
      %s67 = sadd.s32 %s66, 1
      %p70 = scmp.eq.s32.totalorder %s11, 3
      %p71 = scmp.ne.s32.totalorder %s66, %s68
      %p72 = scmp.eq.s32.totalorder %s11, 0
      %p73 = por %p71, %p72
      %p74 = scmp.ne.s32.totalorder %s66, %s68
      %p75 = scmp.eq.s32.totalorder %s16, 3
      %p76 = por %p74, %p75
      %p77 = scmp.ne.s32.totalorder %s68, %s69
      %p78 = scmp.eq.s32.totalorder %s16, 0
      %p79 = por %p77, %p78
      %p80 = scmp.ne.s32.totalorder %s68, %s69
      %p81 = scmp.eq.s32.totalorder %s17, 3
      %p82 = por %p80, %p81
      %p84 = scmp.ne.s32.totalorder %s69, %s83
      %p85 = scmp.eq.s32.totalorder %s17, 0
      %p86 = por %p84, %p85
      %s88 = sadd.s32 %s87, 1
      %p91 = scmp.eq.s32.totalorder %s11, 3
      %p92 = scmp.ne.s32.totalorder %s87, %s89
      %p93 = scmp.eq.s32.totalorder %s11, 0
      %p94 = por %p92, %p93
      %p95 = scmp.ne.s32.totalorder %s87, %s89
      %p96 = scmp.eq.s32.totalorder %s16, 3
      %p97 = por %p95, %p96
      %p98 = scmp.ne.s32.totalorder %s89, %s90
      %p99 = scmp.eq.s32.totalorder %s16, 0
      %p100 = por %p98, %p99
      %p101 = scmp.ne.s32.totalorder %s89, %s90
      %p102 = scmp.eq.s32.totalorder %s17, 3
      %p103 = por %p101, %p102
      %p105 = scmp.ne.s32.totalorder %s90, %s104
      %p106 = scmp.eq.s32.totalorder %s17, 0
      %p107 = por %p105, %p106
      %s109 = sadd.s32 %s108, 1
      %p112 = scmp.eq.s32.totalorder %s11, 3
      %p113 = scmp.ne.s32.totalorder %s108, %s110
      %p114 = scmp.eq.s32.totalorder %s11, 0
      %p115 = por %p113, %p114
      %p116 = scmp.ne.s32.totalorder %s108, %s110
      %p117 = scmp.eq.s32.totalorder %s16, 3
      %p118 = por %p116, %p117
      %p119 = scmp.ne.s32.totalorder %s110, %s111
      %p120 = scmp.eq.s32.totalorder %s16, 0
      %p121 = por %p119, %p120
      %p122 = scmp.ne.s32.totalorder %s110, %s111
      %p123 = scmp.eq.s32.totalorder %s17, 3
      %p124 = por %p122, %p123
      %p126 = scmp.ne.s32.totalorder %s111, %s125
      %p127 = scmp.eq.s32.totalorder %s17, 0
      %p128 = por %p126, %p127
      %s129 = ssub.s32 %s11, %s18
      %p130 = scmp.eq.s32.totalorder %s129, 0
      %s132 = sadd.s32 %s131, 1
      %s133 = scalar_select %p130, %s131, %s132
      %p136 = pneg %p130
      %p137 = scmp.eq.s32.totalorder %s11, 3
      %p138 = por %p136, %p137
      %p139 = scmp.ne.s32.totalorder %s131, %s134
      %p140 = scmp.eq.s32.totalorder %s11, 0
      %p141 = por %p139, %p140
      %p142 = scmp.ne.s32.totalorder %s131, %s134
      %p143 = scmp.eq.s32.totalorder %s16, 3
      %p144 = por %p142, %p143
      %p145 = scmp.ne.s32.totalorder %s134, %s135
      %p146 = scmp.eq.s32.totalorder %s16, 0
      %p147 = por %p145, %p146
      %p148 = scmp.ne.s32.totalorder %s134, %s135
      %p149 = scmp.eq.s32.totalorder %s17, 3
      %p150 = por %p148, %p149
      %p152 = scmp.ne.s32.totalorder %s135, %s151
      %p153 = scmp.eq.s32.totalorder %s17, 0
      %p154 = por %p152, %p153
      %p155 = scmp.le.s32.totalorder 1, %s11
      %p156 = scmp.lt.s32.totalorder %s11, 5
      %p157 = pnand %p155, %p156
      %p158 = pneg %p157
      // Predicated region
      $region9: #{tpu_custom_call.1} parent=5 // pred_check
        _
      $region10: #{tpu_custom_call.1} parent=5 // pred_check_branch
        %160 = sbr.rel (%p157) target = $region12
      $region11: #{tpu_custom_call.1} parent=5 // pred_region
        %s161 = ssub.s32 %s11, 1
        // Predicated region
        $region13: #{tpu_custom_call.1} parent=11 // pred_check
          %p162 = pneg %p58
        $region14: #{tpu_custom_call.1} parent=11 // pred_check_branch
          %164 = sbr.rel (%p162) target = $region16
        $region15: #{tpu_custom_call.1} parent=11 // pred_region
          _
        $region16: #{tpu_custom_call.1} parent=11 // pred_fallthru
          _
        // Predicated region
        $region17: #{tpu_custom_call.1} parent=11 // pred_check
          %p165 = pneg %p79
        $region18: #{tpu_custom_call.1} parent=11 // pred_check_branch
          %167 = sbr.rel (%p165) target = $region20
        $region19: #{tpu_custom_call.1} parent=11 // pred_region
          _
        $region20: #{tpu_custom_call.1} parent=11 // pred_fallthru
          _
        // Predicated region
        $region21: #{tpu_custom_call.1} parent=11 // pred_check
          %p168 = pneg %p100
        $region22: #{tpu_custom_call.1} parent=11 // pred_check_branch
          %170 = sbr.rel (%p168) target = $region24
        $region23: #{tpu_custom_call.1} parent=11 // pred_region
          _
        $region24: #{tpu_custom_call.1} parent=11 // pred_fallthru
          _
        // Predicated region
        $region25: #{tpu_custom_call.1} parent=11 // pred_check
          %p171 = pneg %p121
        $region26: #{tpu_custom_call.1} parent=11 // pred_check_branch
          %173 = sbr.rel (%p171) target = $region28
        $region27: #{tpu_custom_call.1} parent=11 // pred_region
          _
        $region28: #{tpu_custom_call.1} parent=11 // pred_fallthru
          _
      $region12: #{tpu_custom_call.1} parent=5 // pred_fallthru
        _
      %p174 = scmp.lt.s32.totalorder %s11, 4
      // Predicated region
      $region29: #{tpu_custom_call.1} parent=5 // pred_check
        %p175 = pneg %p174
      $region30: #{tpu_custom_call.1} parent=5 // pred_check_branch
        %177 = sbr.rel (%p175) target = $region32
      $region31: #{tpu_custom_call.1} parent=5 // pred_region
        // Predicated region
        $region33: #{tpu_custom_call.1} parent=31 // pred_check
          %p178 = pneg %p31
        $region34: #{tpu_custom_call.1} parent=31 // pred_check_branch
          %180 = sbr.rel (%p178) target = $region36
        $region35: #{tpu_custom_call.1} parent=31 // pred_region
          %s181 = smul.u32 32, %s11
          %s182 = ssub.s32 125, %s181
          %p183 = scmp.lt.s32.totalorder %s182, 32
          %s184 = scalar_select %p183, %s182, 32
          %s185 = smul.u32 8, %s184
          %p186 = scmp.lt.s32.totalorder %s181, 124
          %s187 = scalar_select %p186, %s181, 124
          %s188 = smul.addr %s187, 8
          %s189 = scalar_lea.vmem %s0, %s188
          %s190 = smul.u32 32, %s11
          %s191 = ssub.s32 125, %s190
          %p192 = scmp.lt.s32.totalorder %s191, 32
          %s193 = scalar_select %p192, %s191, 32
          %s194 = smul.u32 8, %s193
        $region36: #{tpu_custom_call.1} parent=31 // pred_fallthru
          _
      $region32: #{tpu_custom_call.1} parent=5 // pred_fallthru
        _
      %p195 = scmp.le.s32.totalorder 1, %s11
      %p196 = scmp.lt.s32.totalorder %s11, 5
      %p197 = pnand %p195, %p196
      %p198 = pneg %p197
      // Predicated region
      $region37: #{tpu_custom_call.1} parent=5 // pred_check
        _
      $region38: #{tpu_custom_call.1} parent=5 // pred_check_branch
        %200 = sbr.rel (%p197) target = $region40
      $region39: #{tpu_custom_call.1} parent=5 // pred_region
        %s201 = ssub.s32 %s11, 1
        %s202 = smul.u32 32, %s16
        %s203 = ssub.s32 125, %s202
        %p204 = scmp.lt.s32.totalorder %s203, 32
        %s205 = scalar_select %p204, %s203, 32
        %s206 = smul.u32 8, %s205
        %p207 = scmp.lt.s32.totalorder %s202, 124
        %s208 = scalar_select %p207, %s202, 124
        %s209 = smul.addr %s208, 8
        %s210 = scalar_lea.vmem %s0, %s209
        %p211 = pneg %p37
        %p212 = pneg %p34
        %p213 = pneg %p58
        %p214 = pneg %p55
        %p215 = pneg %p79
        %p216 = pneg %p76
        %p217 = pneg %p100
        %p218 = pneg %p97
        %p219 = pneg %p121
        %p220 = pneg %p118
        %p221 = pneg %p147
        %p222 = pneg %p144
        %s223 = sand.u32 %s134, 1
        %s224 = sand.u32 %s134, 1
        %s225 = smul.addr %s224, 256
        %s226 = scalar_lea.vmem [#allocation2], %s225
        %s227 = smul.u32 32, %s16
        %s228 = ssub.s32 125, %s227
        %p229 = scmp.lt.s32.totalorder %s228, 32
        %s230 = scalar_select %p229, %s228, 32
        %s231 = smul.u32 8, %s230
        %p232 = scmp.lt.s32.totalorder %s227, 124
        %s233 = scalar_select %p232, %s227, 124
        %s234 = smul.addr %s233, 8
        %s235 = scalar_lea.vmem %s0, %s234
        %s236 = smul.u32 32, %s16
        %s237 = ssub.s32 125, %s236
        %p238 = scmp.lt.s32.totalorder %s237, 32
        %s239 = scalar_select %p238, %s237, 32
        %s240 = smul.u32 8, %s239
        %s241 = smul.u32 32, %s16
        %s242 = ssub.s32 125, %s241
        %p243 = scmp.lt.s32.totalorder %s242, 32
        %s244 = scalar_select %p243, %s242, 32
        %s245 = smul.u32 8, %s244
        %v246 = vld [vmem:[%s235] sm:$0xff]
        %v247 = vld [vmem:[%s235 + $0x8] sm:$0xff]
        %v248 = vld [vmem:[%s235 + $0x10] sm:$0xff]
        %v249 = vld [vmem:[%s235 + $0x18] sm:$0xff]
        %v250 = vld [vmem:[%s235 + $0x20] sm:$0xff]
        %v251 = vld [vmem:[%s235 + $0x28] sm:$0xff]
        %v252 = vld [vmem:[%s235 + $0x30] sm:$0xff]
        %v253 = vld [vmem:[%s235 + $0x38] sm:$0xff]
        %v254 = vld [vmem:[%s235 + $0x40] sm:$0xff]
        %v255 = vld [vmem:[%s235 + $0x48] sm:$0xff]
        %v256 = vld [vmem:[%s235 + $0x50] sm:$0xff]
        %v257 = vld [vmem:[%s235 + $0x58] sm:$0xff]
        %v258 = vld [vmem:[%s235 + $0x60] sm:$0xff]
        %v259 = vld [vmem:[%s235 + $0x68] sm:$0xff]
        %v260 = vld [vmem:[%s235 + $0x70] sm:$0xff]
        %v261 = vld [vmem:[%s235 + $0x78] sm:$0xff]
        %v262 = vld [vmem:[%s235 + $0x80] sm:$0xff]
        %v263 = vld [vmem:[%s235 + $0x88] sm:$0xff]
        %v264 = vld [vmem:[%s235 + $0x90] sm:$0xff]
        %v265 = vld [vmem:[%s235 + $0x98] sm:$0xff]
        %v266 = vld [vmem:[%s235 + $0xa0] sm:$0xff]
        %v267 = vld [vmem:[%s235 + $0xa8] sm:$0xff]
        %v268 = vld [vmem:[%s235 + $0xb0] sm:$0xff]
        %v269 = vld [vmem:[%s235 + $0xb8] sm:$0xff]
        %v270 = vld [vmem:[%s235 + $0xc0] sm:$0xff]
        %v271 = vld [vmem:[%s235 + $0xc8] sm:$0xff]
        %v272 = vld [vmem:[%s235 + $0xd0] sm:$0xff]
        %v273 = vld [vmem:[%s235 + $0xd8] sm:$0xff]
        %v274 = vld [vmem:[%s235 + $0xe0] sm:$0xff]
        %v275 = vld [vmem:[%s235 + $0xe8] sm:$0xff]
        %v276 = vld [vmem:[%s235 + $0xf0] sm:$0xff]
        %v277 = vld [vmem:[%s235 + $0xf8] sm:$0xff]
        %v278 = vmul.f32 %v246, %v246
        %v279 = vmul.f32 %v247, %v247
        %v280 = vmul.f32 %v248, %v248
        %v281 = vmul.f32 %v249, %v249
        %v282 = vmul.f32 %v250, %v250
        %v283 = vmul.f32 %v251, %v251
        %v284 = vmul.f32 %v252, %v252
        %v285 = vmul.f32 %v253, %v253
        %v286 = vmul.f32 %v254, %v254
        %v287 = vmul.f32 %v255, %v255
        %v288 = vmul.f32 %v256, %v256
        %v289 = vmul.f32 %v257, %v257
        %v290 = vmul.f32 %v258, %v258
        %v291 = vmul.f32 %v259, %v259
        %v292 = vmul.f32 %v260, %v260
        %v293 = vmul.f32 %v261, %v261
        %v294 = vmul.f32 %v262, %v262
        %v295 = vmul.f32 %v263, %v263
        %v296 = vmul.f32 %v264, %v264
        %v297 = vmul.f32 %v265, %v265
        %v298 = vmul.f32 %v266, %v266
        %v299 = vmul.f32 %v267, %v267
        %v300 = vmul.f32 %v268, %v268
        %v301 = vmul.f32 %v269, %v269
        %v302 = vmul.f32 %v270, %v270
        %v303 = vmul.f32 %v271, %v271
        %v304 = vmul.f32 %v272, %v272
        %v305 = vmul.f32 %v273, %v273
        %v306 = vmul.f32 %v274, %v274
        %v307 = vmul.f32 %v275, %v275
        %v308 = vmul.f32 %v276, %v276
        %v309 = vmul.f32 %v277, %v277
        %v310 = vld [vmem:[%s1] sm:$0xff]
        %v311 = vld [vmem:[%s1 + $0x8] sm:$0x1]
        %344 = vrot.lane.b32.xlu0 %v246, 125
        %v345 = vpop.permute.xlu0 %344
        %346 = vrot.lane.b32.xlu0 %v247, 125
        %v347 = vpop.permute.xlu0 %346
        %348 = vrot.lane.b32.xlu0 %v248, 125
        %v349 = vpop.permute.xlu0 %348
        %350 = vrot.lane.b32.xlu0 %v249, 125
        %v351 = vpop.permute.xlu0 %350
        %352 = vrot.lane.b32.xlu0 %v250, 125
        %v353 = vpop.permute.xlu0 %352
        %354 = vrot.lane.b32.xlu0 %v251, 125
        %v355 = vpop.permute.xlu0 %354
        %356 = vrot.lane.b32.xlu0 %v252, 125
        %v357 = vpop.permute.xlu0 %356
        %358 = vrot.lane.b32.xlu0 %v253, 125
        %v359 = vpop.permute.xlu0 %358
        %360 = vrot.lane.b32.xlu0 %v254, 125
        %v361 = vpop.permute.xlu0 %360
        %362 = vrot.lane.b32.xlu0 %v255, 125
        %v363 = vpop.permute.xlu0 %362
        %364 = vrot.lane.b32.xlu0 %v256, 125
        %v365 = vpop.permute.xlu0 %364
        %366 = vrot.lane.b32.xlu0 %v257, 125
        %v367 = vpop.permute.xlu0 %366
        %368 = vrot.lane.b32.xlu0 %v258, 125
        %v369 = vpop.permute.xlu0 %368
        %370 = vrot.lane.b32.xlu0 %v259, 125
        %v371 = vpop.permute.xlu0 %370
        %372 = vrot.lane.b32.xlu0 %v260, 125
        %v373 = vpop.permute.xlu0 %372
        %374 = vrot.lane.b32.xlu0 %v261, 125
        %v375 = vpop.permute.xlu0 %374
        %376 = vrot.lane.b32.xlu0 %v262, 125
        %v377 = vpop.permute.xlu0 %376
        %378 = vrot.lane.b32.xlu0 %v263, 125
        %v379 = vpop.permute.xlu0 %378
        %380 = vrot.lane.b32.xlu0 %v264, 125
        %v381 = vpop.permute.xlu0 %380
        %382 = vrot.lane.b32.xlu0 %v265, 125
        %v383 = vpop.permute.xlu0 %382
        %384 = vrot.lane.b32.xlu0 %v266, 125
        %v385 = vpop.permute.xlu0 %384
        %386 = vrot.lane.b32.xlu0 %v267, 125
        %v387 = vpop.permute.xlu0 %386
        %388 = vrot.lane.b32.xlu0 %v268, 125
        %v389 = vpop.permute.xlu0 %388
        %390 = vrot.lane.b32.xlu0 %v269, 125
        %v391 = vpop.permute.xlu0 %390
        %392 = vrot.lane.b32.xlu0 %v270, 125
        %v393 = vpop.permute.xlu0 %392
        %394 = vrot.lane.b32.xlu0 %v271, 125
        %v395 = vpop.permute.xlu0 %394
        %396 = vrot.lane.b32.xlu0 %v272, 125
        %v397 = vpop.permute.xlu0 %396
        %398 = vrot.lane.b32.xlu0 %v273, 125
        %v399 = vpop.permute.xlu0 %398
        %400 = vrot.lane.b32.xlu0 %v274, 125
        %v401 = vpop.permute.xlu0 %400
        %402 = vrot.lane.b32.xlu0 %v275, 125
        %v403 = vpop.permute.xlu0 %402
        %404 = vrot.lane.b32.xlu0 %v276, 125
        %v405 = vpop.permute.xlu0 %404
        %406 = vrot.lane.b32.xlu0 %v277, 125
        %v407 = vpop.permute.xlu0 %406
        %440 = vrot.lane.b32.xlu0 %v246, 6
        %v441 = vpop.permute.xlu0 %440
        %442 = vrot.lane.b32.xlu0 %v247, 6
        %v443 = vpop.permute.xlu0 %442
        %444 = vrot.lane.b32.xlu0 %v248, 6
        %v445 = vpop.permute.xlu0 %444
        %446 = vrot.lane.b32.xlu0 %v249, 6
        %v447 = vpop.permute.xlu0 %446
        %448 = vrot.lane.b32.xlu0 %v250, 6
        %v449 = vpop.permute.xlu0 %448
        %450 = vrot.lane.b32.xlu0 %v251, 6
        %v451 = vpop.permute.xlu0 %450
        %452 = vrot.lane.b32.xlu0 %v252, 6
        %v453 = vpop.permute.xlu0 %452
        %454 = vrot.lane.b32.xlu0 %v253, 6
        %v455 = vpop.permute.xlu0 %454
        %456 = vrot.lane.b32.xlu0 %v254, 6
        %v457 = vpop.permute.xlu0 %456
        %458 = vrot.lane.b32.xlu0 %v255, 6
        %v459 = vpop.permute.xlu0 %458
        %460 = vrot.lane.b32.xlu0 %v256, 6
        %v461 = vpop.permute.xlu0 %460
        %462 = vrot.lane.b32.xlu0 %v257, 6
        %v463 = vpop.permute.xlu0 %462
        %464 = vrot.lane.b32.xlu0 %v258, 6
        %v465 = vpop.permute.xlu0 %464
        %466 = vrot.lane.b32.xlu0 %v259, 6
        %v467 = vpop.permute.xlu0 %466
        %468 = vrot.lane.b32.xlu0 %v260, 6
        %v469 = vpop.permute.xlu0 %468
        %470 = vrot.lane.b32.xlu0 %v261, 6
        %v471 = vpop.permute.xlu0 %470
        %472 = vrot.lane.b32.xlu0 %v262, 6
        %v473 = vpop.permute.xlu0 %472
        %474 = vrot.lane.b32.xlu0 %v263, 6
        %v475 = vpop.permute.xlu0 %474
        %476 = vrot.lane.b32.xlu0 %v264, 6
        %v477 = vpop.permute.xlu0 %476
        %478 = vrot.lane.b32.xlu0 %v265, 6
        %v479 = vpop.permute.xlu0 %478
        %480 = vrot.lane.b32.xlu0 %v266, 6
        %v481 = vpop.permute.xlu0 %480
        %482 = vrot.lane.b32.xlu0 %v267, 6
        %v483 = vpop.permute.xlu0 %482
        %484 = vrot.lane.b32.xlu0 %v268, 6
        %v485 = vpop.permute.xlu0 %484
        %486 = vrot.lane.b32.xlu0 %v269, 6
        %v487 = vpop.permute.xlu0 %486
        %488 = vrot.lane.b32.xlu0 %v270, 6
        %v489 = vpop.permute.xlu0 %488
        %490 = vrot.lane.b32.xlu0 %v271, 6
        %v491 = vpop.permute.xlu0 %490
        %492 = vrot.lane.b32.xlu0 %v272, 6
        %v493 = vpop.permute.xlu0 %492
        %494 = vrot.lane.b32.xlu0 %v273, 6
        %v495 = vpop.permute.xlu0 %494
        %496 = vrot.lane.b32.xlu0 %v274, 6
        %v497 = vpop.permute.xlu0 %496
        %498 = vrot.lane.b32.xlu0 %v275, 6
        %v499 = vpop.permute.xlu0 %498
        %500 = vrot.lane.b32.xlu0 %v276, 6
        %v501 = vpop.permute.xlu0 %500
        %502 = vrot.lane.b32.xlu0 %v277, 6
        %v503 = vpop.permute.xlu0 %502
        %vm536 = vcmask 48128
        %v537 = vsel %vm536, %v345, %v441
        %v538 = vsel %vm536, %v347, %v443
        %v539 = vsel %vm536, %v349, %v445
        %v540 = vsel %vm536, %v351, %v447
        %v541 = vsel %vm536, %v353, %v449
        %v542 = vsel %vm536, %v355, %v451
        %v543 = vsel %vm536, %v357, %v453
        %v544 = vsel %vm536, %v359, %v455
        %v545 = vsel %vm536, %v361, %v457
        %v546 = vsel %vm536, %v363, %v459
        %v547 = vsel %vm536, %v365, %v461
        %v548 = vsel %vm536, %v367, %v463
        %v549 = vsel %vm536, %v369, %v465
        %v550 = vsel %vm536, %v371, %v467
        %v551 = vsel %vm536, %v373, %v469
        %v552 = vsel %vm536, %v375, %v471
        %v553 = vsel %vm536, %v377, %v473
        %v554 = vsel %vm536, %v379, %v475
        %v555 = vsel %vm536, %v381, %v477
        %v556 = vsel %vm536, %v383, %v479
        %v557 = vsel %vm536, %v385, %v481
        %v558 = vsel %vm536, %v387, %v483
        %v559 = vsel %vm536, %v389, %v485
        %v560 = vsel %vm536, %v391, %v487
        %v561 = vsel %vm536, %v393, %v489
        %v562 = vsel %vm536, %v395, %v491
        %v563 = vsel %vm536, %v397, %v493
        %v564 = vsel %vm536, %v399, %v495
        %v565 = vsel %vm536, %v401, %v497
        %v566 = vsel %vm536, %v403, %v499
        %v567 = vsel %vm536, %v405, %v501
        %v568 = vsel %vm536, %v407, %v503
        %v569 = vmul.f32 %v246, %v537
        %v570 = vmul.f32 %v247, %v538
        %v571 = vmul.f32 %v248, %v539
        %v572 = vmul.f32 %v249, %v540
        %v573 = vmul.f32 %v250, %v541
        %v574 = vmul.f32 %v251, %v542
        %v575 = vmul.f32 %v252, %v543
        %v576 = vmul.f32 %v253, %v544
        %v577 = vmul.f32 %v254, %v545
        %v578 = vmul.f32 %v255, %v546
        %v579 = vmul.f32 %v256, %v547
        %v580 = vmul.f32 %v257, %v548
        %v581 = vmul.f32 %v258, %v549
        %v582 = vmul.f32 %v259, %v550
        %v583 = vmul.f32 %v260, %v551
        %v584 = vmul.f32 %v261, %v552
        %v585 = vmul.f32 %v262, %v553
        %v586 = vmul.f32 %v263, %v554
        %v587 = vmul.f32 %v264, %v555
        %v588 = vmul.f32 %v265, %v556
        %v589 = vmul.f32 %v266, %v557
        %v590 = vmul.f32 %v267, %v558
        %v591 = vmul.f32 %v268, %v559
        %v592 = vmul.f32 %v269, %v560
        %v593 = vmul.f32 %v270, %v561
        %v594 = vmul.f32 %v271, %v562
        %v595 = vmul.f32 %v272, %v563
        %v596 = vmul.f32 %v273, %v564
        %v597 = vmul.f32 %v274, %v565
        %v598 = vmul.f32 %v275, %v566
        %v599 = vmul.f32 %v276, %v567
        %v600 = vmul.f32 %v277, %v568
        %s601 = scalar_lea.vmem %s1, 16
        %v602 = vld [vmem:[%s601] sm:$0xff]
        %v603 = vld [vmem:[%s601 + $0x8] sm:$0x1]
        %vm604 = vcmask 72704
        %v606 = vsel %vm604, %v569, 0
        %v609 = vsel %vm604, %v570, 0
        %v612 = vsel %vm604, %v571, 0
        %v615 = vsel %vm604, %v572, 0
        %v618 = vsel %vm604, %v573, 0
        %v621 = vsel %vm604, %v574, 0
        %v624 = vsel %vm604, %v575, 0
        %v627 = vsel %vm604, %v576, 0
        %v630 = vsel %vm604, %v577, 0
        %v633 = vsel %vm604, %v578, 0
        %v636 = vsel %vm604, %v579, 0
        %v639 = vsel %vm604, %v580, 0
        %v642 = vsel %vm604, %v581, 0
        %v645 = vsel %vm604, %v582, 0
        %v648 = vsel %vm604, %v583, 0
        %v651 = vsel %vm604, %v584, 0
        %v654 = vsel %vm604, %v585, 0
        %v657 = vsel %vm604, %v586, 0
        %v660 = vsel %vm604, %v587, 0
        %v663 = vsel %vm604, %v588, 0
        %v666 = vsel %vm604, %v589, 0
        %v669 = vsel %vm604, %v590, 0
        %v672 = vsel %vm604, %v591, 0
        %v675 = vsel %vm604, %v592, 0
        %v678 = vsel %vm604, %v593, 0
        %v681 = vsel %vm604, %v594, 0
        %v684 = vsel %vm604, %v595, 0
        %v687 = vsel %vm604, %v596, 0
        %v690 = vsel %vm604, %v597, 0
        %v693 = vsel %vm604, %v598, 0
        %v696 = vsel %vm604, %v599, 0
        %v699 = vsel %vm604, %v600, 0
        %vm701 = vcmask 1040384
        %v703 = vsel %vm701, %v603, 0
        %705 = vmatpush.msra.mxu0 0.0
        %706 = vmatpush.msra.mxu0 0.0
        %707 = vmatpush.msra.mxu0 0.0
        %708 = vmatpush.msra.mxu0 0.0
        %709 = vmatpush.msra.mxu0 0.0
        %710 = vmatpush.msra.mxu0 0.0
        %711 = vmatpush.msra.mxu0 0.0
        %712 = vmatpush.msra.mxu0 0.0
        %713 = vmatpush.msra.mxu0 0.0
        %714 = vmatpush.msra.mxu0 0.0
        %715 = vmatpush.msra.mxu0 0.0
        %716 = vmatpush.msra.mxu0 0.0
        %717 = vmatpush.msra.mxu0 0.0
        %718 = vmatpush.msra.mxu0 0.0
        %719 = vmatpush.msra.mxu0 %v703
        %720 = vmatpush.msra.mxu0 %v602
        %721 = vmatmul.f32.gmra.mxu0 %v606
        %v722 = vpop.f32.mrf.mxu0
        %v723 = vadd.f32 0.0, %v722
        %724 = vmatmul.f32.gmra.mxu0 %v609
        %v725 = vpop.f32.mrf.mxu0
        %v726 = vadd.f32 0.0, %v725
        %727 = vmatmul.f32.gmra.mxu0 %v612
        %v728 = vpop.f32.mrf.mxu0
        %v729 = vadd.f32 0.0, %v728
        %730 = vmatmul.f32.gmra.mxu0 %v615
        %v731 = vpop.f32.mrf.mxu0
        %v732 = vadd.f32 0.0, %v731
        %733 = vmatmul.f32.gmra.mxu0 %v618
        %v734 = vpop.f32.mrf.mxu0
        %v735 = vadd.f32 0.0, %v734
        %736 = vmatmul.f32.gmra.mxu0 %v621
        %v737 = vpop.f32.mrf.mxu0
        %v738 = vadd.f32 0.0, %v737
        %739 = vmatmul.f32.gmra.mxu0 %v624
        %v740 = vpop.f32.mrf.mxu0
        %v741 = vadd.f32 0.0, %v740
        %742 = vmatmul.f32.gmra.mxu0 %v627
        %v743 = vpop.f32.mrf.mxu0
        %v744 = vadd.f32 0.0, %v743
        %745 = vmatmul.f32.gmra.mxu0 %v630
        %v746 = vpop.f32.mrf.mxu0
        %v747 = vadd.f32 0.0, %v746
        %748 = vmatmul.f32.gmra.mxu0 %v633
        %v749 = vpop.f32.mrf.mxu0
        %v750 = vadd.f32 0.0, %v749
        %751 = vmatmul.f32.gmra.mxu0 %v636
        %v752 = vpop.f32.mrf.mxu0
        %v753 = vadd.f32 0.0, %v752
        %754 = vmatmul.f32.gmra.mxu0 %v639
        %v755 = vpop.f32.mrf.mxu0
        %v756 = vadd.f32 0.0, %v755
        %757 = vmatmul.f32.gmra.mxu0 %v642
        %v758 = vpop.f32.mrf.mxu0
        %v759 = vadd.f32 0.0, %v758
        %760 = vmatmul.f32.gmra.mxu0 %v645
        %v761 = vpop.f32.mrf.mxu0
        %v762 = vadd.f32 0.0, %v761
        %763 = vmatmul.f32.gmra.mxu0 %v648
        %v764 = vpop.f32.mrf.mxu0
        %v765 = vadd.f32 0.0, %v764
        %766 = vmatmul.f32.gmra.mxu0 %v651
        %v767 = vpop.f32.mrf.mxu0
        %v768 = vadd.f32 0.0, %v767
        %769 = vmatmul.f32.gmra.mxu0 %v654
        %v770 = vpop.f32.mrf.mxu0
        %v771 = vadd.f32 0.0, %v770
        %772 = vmatmul.f32.gmra.mxu0 %v657
        %v773 = vpop.f32.mrf.mxu0
        %v774 = vadd.f32 0.0, %v773
        %775 = vmatmul.f32.gmra.mxu0 %v660
        %v776 = vpop.f32.mrf.mxu0
        %v777 = vadd.f32 0.0, %v776
        %778 = vmatmul.f32.gmra.mxu0 %v663
        %v779 = vpop.f32.mrf.mxu0
        %v780 = vadd.f32 0.0, %v779
        %781 = vmatmul.f32.gmra.mxu0 %v666
        %v782 = vpop.f32.mrf.mxu0
        %v783 = vadd.f32 0.0, %v782
        %784 = vmatmul.f32.gmra.mxu0 %v669
        %v785 = vpop.f32.mrf.mxu0
        %v786 = vadd.f32 0.0, %v785
        %787 = vmatmul.f32.gmra.mxu0 %v672
        %v788 = vpop.f32.mrf.mxu0
        %v789 = vadd.f32 0.0, %v788
        %790 = vmatmul.f32.gmra.mxu0 %v675
        %v791 = vpop.f32.mrf.mxu0
        %v792 = vadd.f32 0.0, %v791
        %793 = vmatmul.f32.gmra.mxu0 %v678
        %v794 = vpop.f32.mrf.mxu0
        %v795 = vadd.f32 0.0, %v794
        %796 = vmatmul.f32.gmra.mxu0 %v681
        %v797 = vpop.f32.mrf.mxu0
        %v798 = vadd.f32 0.0, %v797
        %799 = vmatmul.f32.gmra.mxu0 %v684
        %v800 = vpop.f32.mrf.mxu0
        %v801 = vadd.f32 0.0, %v800
        %802 = vmatmul.f32.gmra.mxu0 %v687
        %v803 = vpop.f32.mrf.mxu0
        %v804 = vadd.f32 0.0, %v803
        %805 = vmatmul.f32.gmra.mxu0 %v690
        %v806 = vpop.f32.mrf.mxu0
        %v807 = vadd.f32 0.0, %v806
        %808 = vmatmul.f32.gmra.mxu0 %v693
        %v809 = vpop.f32.mrf.mxu0
        %v810 = vadd.f32 0.0, %v809
        %811 = vmatmul.f32.gmra.mxu0 %v696
        %v812 = vpop.f32.mrf.mxu0
        %v813 = vadd.f32 0.0, %v812
        %814 = vmatmul.f32.gmra.mxu0 %v699
        %v815 = vpop.f32.mrf.mxu0
        %v816 = vadd.f32 0.0, %v815
        %817 = vdwg.mxu0
        %v819 = vsel %vm604, %v278, 0
        %v822 = vsel %vm604, %v279, 0
        %v825 = vsel %vm604, %v280, 0
        %v828 = vsel %vm604, %v281, 0
        %v831 = vsel %vm604, %v282, 0
        %v834 = vsel %vm604, %v283, 0
        %v837 = vsel %vm604, %v284, 0
        %v840 = vsel %vm604, %v285, 0
        %v843 = vsel %vm604, %v286, 0
        %v846 = vsel %vm604, %v287, 0
        %v849 = vsel %vm604, %v288, 0
        %v852 = vsel %vm604, %v289, 0
        %v855 = vsel %vm604, %v290, 0
        %v858 = vsel %vm604, %v291, 0
        %v861 = vsel %vm604, %v292, 0
        %v864 = vsel %vm604, %v293, 0
        %v867 = vsel %vm604, %v294, 0
        %v870 = vsel %vm604, %v295, 0
        %v873 = vsel %vm604, %v296, 0
        %v876 = vsel %vm604, %v297, 0
        %v879 = vsel %vm604, %v298, 0
        %v882 = vsel %vm604, %v299, 0
        %v885 = vsel %vm604, %v300, 0
        %v888 = vsel %vm604, %v301, 0
        %v891 = vsel %vm604, %v302, 0
        %v894 = vsel %vm604, %v303, 0
        %v897 = vsel %vm604, %v304, 0
        %v900 = vsel %vm604, %v305, 0
        %v903 = vsel %vm604, %v306, 0
        %v906 = vsel %vm604, %v307, 0
        %v909 = vsel %vm604, %v308, 0
        %v912 = vsel %vm604, %v309, 0
        %v915 = vsel %vm701, %v311, 0
        %917 = vmatpush.msra.mxu0 0.0
        %918 = vmatpush.msra.mxu0 0.0
        %919 = vmatpush.msra.mxu0 0.0
        %920 = vmatpush.msra.mxu0 0.0
        %921 = vmatpush.msra.mxu0 0.0
        %922 = vmatpush.msra.mxu0 0.0
        %923 = vmatpush.msra.mxu0 0.0
        %924 = vmatpush.msra.mxu0 0.0
        %925 = vmatpush.msra.mxu0 0.0
        %926 = vmatpush.msra.mxu0 0.0
        %927 = vmatpush.msra.mxu0 0.0
        %928 = vmatpush.msra.mxu0 0.0
        %929 = vmatpush.msra.mxu0 0.0
        %930 = vmatpush.msra.mxu0 0.0
        %931 = vmatpush.msra.mxu0 %v915
        %932 = vmatpush.msra.mxu0 %v310
        %933 = vmatmul.f32.gmra.mxu0 %v819
        %v934 = vpop.f32.mrf.mxu0
        %v935 = vadd.f32 %v723, %v934
        %936 = vmatmul.f32.gmra.mxu0 %v822
        %v937 = vpop.f32.mrf.mxu0
        %v938 = vadd.f32 %v726, %v937
        %939 = vmatmul.f32.gmra.mxu0 %v825
        %v940 = vpop.f32.mrf.mxu0
        %v941 = vadd.f32 %v729, %v940
        %942 = vmatmul.f32.gmra.mxu0 %v828
        %v943 = vpop.f32.mrf.mxu0
        %v944 = vadd.f32 %v732, %v943
        %945 = vmatmul.f32.gmra.mxu0 %v831
        %v946 = vpop.f32.mrf.mxu0
        %v947 = vadd.f32 %v735, %v946
        %948 = vmatmul.f32.gmra.mxu0 %v834
        %v949 = vpop.f32.mrf.mxu0
        %v950 = vadd.f32 %v738, %v949
        %951 = vmatmul.f32.gmra.mxu0 %v837
        %v952 = vpop.f32.mrf.mxu0
        %v953 = vadd.f32 %v741, %v952
        %954 = vmatmul.f32.gmra.mxu0 %v840
        %v955 = vpop.f32.mrf.mxu0
        %v956 = vadd.f32 %v744, %v955
        %957 = vmatmul.f32.gmra.mxu0 %v843
        %v958 = vpop.f32.mrf.mxu0
        %v959 = vadd.f32 %v747, %v958
        %960 = vmatmul.f32.gmra.mxu0 %v846
        %v961 = vpop.f32.mrf.mxu0
        %v962 = vadd.f32 %v750, %v961
        %963 = vmatmul.f32.gmra.mxu0 %v849
        %v964 = vpop.f32.mrf.mxu0
        %v965 = vadd.f32 %v753, %v964
        %966 = vmatmul.f32.gmra.mxu0 %v852
        %v967 = vpop.f32.mrf.mxu0
        %v968 = vadd.f32 %v756, %v967
        %969 = vmatmul.f32.gmra.mxu0 %v855
        %v970 = vpop.f32.mrf.mxu0
        %v971 = vadd.f32 %v759, %v970
        %972 = vmatmul.f32.gmra.mxu0 %v858
        %v973 = vpop.f32.mrf.mxu0
        %v974 = vadd.f32 %v762, %v973
        %975 = vmatmul.f32.gmra.mxu0 %v861
        %v976 = vpop.f32.mrf.mxu0
        %v977 = vadd.f32 %v765, %v976
        %978 = vmatmul.f32.gmra.mxu0 %v864
        %v979 = vpop.f32.mrf.mxu0
        %v980 = vadd.f32 %v768, %v979
        %981 = vmatmul.f32.gmra.mxu0 %v867
        %v982 = vpop.f32.mrf.mxu0
        %v983 = vadd.f32 %v771, %v982
        %984 = vmatmul.f32.gmra.mxu0 %v870
        %v985 = vpop.f32.mrf.mxu0
        %v986 = vadd.f32 %v774, %v985
        %987 = vmatmul.f32.gmra.mxu0 %v873
        %v988 = vpop.f32.mrf.mxu0
        %v989 = vadd.f32 %v777, %v988
        %990 = vmatmul.f32.gmra.mxu0 %v876
        %v991 = vpop.f32.mrf.mxu0
        %v992 = vadd.f32 %v780, %v991
        %993 = vmatmul.f32.gmra.mxu0 %v879
        %v994 = vpop.f32.mrf.mxu0
        %v995 = vadd.f32 %v783, %v994
        %996 = vmatmul.f32.gmra.mxu0 %v882
        %v997 = vpop.f32.mrf.mxu0
        %v998 = vadd.f32 %v786, %v997
        %999 = vmatmul.f32.gmra.mxu0 %v885
        %v1000 = vpop.f32.mrf.mxu0
        %v1001 = vadd.f32 %v789, %v1000
        %1002 = vmatmul.f32.gmra.mxu0 %v888
        %v1003 = vpop.f32.mrf.mxu0
        %v1004 = vadd.f32 %v792, %v1003
        %1005 = vmatmul.f32.gmra.mxu0 %v891
        %v1006 = vpop.f32.mrf.mxu0
        %v1007 = vadd.f32 %v795, %v1006
        %1008 = vmatmul.f32.gmra.mxu0 %v894
        %v1009 = vpop.f32.mrf.mxu0
        %v1010 = vadd.f32 %v798, %v1009
        %1011 = vmatmul.f32.gmra.mxu0 %v897
        %v1012 = vpop.f32.mrf.mxu0
        %v1013 = vadd.f32 %v801, %v1012
        %1014 = vmatmul.f32.gmra.mxu0 %v900
        %v1015 = vpop.f32.mrf.mxu0
        %v1016 = vadd.f32 %v804, %v1015
        %1017 = vmatmul.f32.gmra.mxu0 %v903
        %v1018 = vpop.f32.mrf.mxu0
        %v1019 = vadd.f32 %v807, %v1018
        %1020 = vmatmul.f32.gmra.mxu0 %v906
        %v1021 = vpop.f32.mrf.mxu0
        %v1022 = vadd.f32 %v810, %v1021
        %1023 = vmatmul.f32.gmra.mxu0 %v909
        %v1024 = vpop.f32.mrf.mxu0
        %v1025 = vadd.f32 %v813, %v1024
        %1026 = vmatmul.f32.gmra.mxu0 %v912
        %v1027 = vpop.f32.mrf.mxu0
        %v1028 = vadd.f32 %v816, %v1027
        %1029 = vdwg.mxu0
        %v1030 = vld [vmem:[%s2] sm:$0x1]
        %v1032 = vperm.slane %v1030, 0
        %v1034 = vadd.f32 %v935, %v1032
        %v1035 = vadd.f32 %v938, %v1032
        %v1036 = vadd.f32 %v941, %v1032
        %v1037 = vadd.f32 %v944, %v1032
        %v1038 = vadd.f32 %v947, %v1032
        %v1039 = vadd.f32 %v950, %v1032
        %v1040 = vadd.f32 %v953, %v1032
        %v1041 = vadd.f32 %v956, %v1032
        %v1042 = vadd.f32 %v959, %v1032
        %v1043 = vadd.f32 %v962, %v1032
        %v1044 = vadd.f32 %v965, %v1032
        %v1045 = vadd.f32 %v968, %v1032
        %v1046 = vadd.f32 %v971, %v1032
        %v1047 = vadd.f32 %v974, %v1032
        %v1048 = vadd.f32 %v977, %v1032
        %v1049 = vadd.f32 %v980, %v1032
        %v1050 = vadd.f32 %v983, %v1032
        %v1051 = vadd.f32 %v986, %v1032
        %v1052 = vadd.f32 %v989, %v1032
        %v1053 = vadd.f32 %v992, %v1032
        %v1054 = vadd.f32 %v995, %v1032
        %v1055 = vadd.f32 %v998, %v1032
        %v1056 = vadd.f32 %v1001, %v1032
        %v1057 = vadd.f32 %v1004, %v1032
        %v1058 = vadd.f32 %v1007, %v1032
        %v1059 = vadd.f32 %v1010, %v1032
        %v1060 = vadd.f32 %v1013, %v1032
        %v1061 = vadd.f32 %v1016, %v1032
        %v1062 = vadd.f32 %v1019, %v1032
        %v1063 = vadd.f32 %v1022, %v1032
        %v1064 = vadd.f32 %v1025, %v1032
        %v1065 = vadd.f32 %v1028, %v1032
        %v1066 = vmax.f32 %v1034, 0.0
        %v1067 = vmax.f32 %v1035, 0.0
        %v1068 = vmax.f32 %v1036, 0.0
        %v1069 = vmax.f32 %v1037, 0.0
        %v1070 = vmax.f32 %v1038, 0.0
        %v1071 = vmax.f32 %v1039, 0.0
        %v1072 = vmax.f32 %v1040, 0.0
        %v1073 = vmax.f32 %v1041, 0.0
        %v1074 = vmax.f32 %v1042, 0.0
        %v1075 = vmax.f32 %v1043, 0.0
        %v1076 = vmax.f32 %v1044, 0.0
        %v1077 = vmax.f32 %v1045, 0.0
        %v1078 = vmax.f32 %v1046, 0.0
        %v1079 = vmax.f32 %v1047, 0.0
        %v1080 = vmax.f32 %v1048, 0.0
        %v1081 = vmax.f32 %v1049, 0.0
        %v1082 = vmax.f32 %v1050, 0.0
        %v1083 = vmax.f32 %v1051, 0.0
        %v1084 = vmax.f32 %v1052, 0.0
        %v1085 = vmax.f32 %v1053, 0.0
        %v1086 = vmax.f32 %v1054, 0.0
        %v1087 = vmax.f32 %v1055, 0.0
        %v1088 = vmax.f32 %v1056, 0.0
        %v1089 = vmax.f32 %v1057, 0.0
        %v1090 = vmax.f32 %v1058, 0.0
        %v1091 = vmax.f32 %v1059, 0.0
        %v1092 = vmax.f32 %v1060, 0.0
        %v1093 = vmax.f32 %v1061, 0.0
        %v1094 = vmax.f32 %v1062, 0.0
        %v1095 = vmax.f32 %v1063, 0.0
        %v1096 = vmax.f32 %v1064, 0.0
        %v1097 = vmax.f32 %v1065, 0.0
        %v1098 = vld [vmem:[%s3] sm:$0xff]
        %v1099 = vld [vmem:[%s3 + $0x8] sm:$0xff]
        %v1100 = vld [vmem:[%s3 + $0x10] sm:$0xff]
        %v1101 = vld [vmem:[%s3 + $0x18] sm:$0xff]
        %v1102 = vld [vmem:[%s3 + $0x20] sm:$0xff]
        %v1103 = vld [vmem:[%s3 + $0x28] sm:$0xff]
        %v1104 = vld [vmem:[%s3 + $0x30] sm:$0xff]
        %v1105 = vld [vmem:[%s3 + $0x38] sm:$0xff]
        %v1106 = vld [vmem:[%s4] sm:$0x1]
        %v1108 = vperm.slane %v1106, 0
        %vm1110 = vcmask 523264
        %v1112 = vsel %vm1110, %v1066, 0
        %v1115 = vsel %vm1110, %v1067, 0
        %v1118 = vsel %vm1110, %v1068, 0
        %v1121 = vsel %vm1110, %v1069, 0
        %v1124 = vsel %vm1110, %v1070, 0
        %v1127 = vsel %vm1110, %v1071, 0
        %v1130 = vsel %vm1110, %v1072, 0
        %v1133 = vsel %vm1110, %v1073, 0
        %v1136 = vsel %vm1110, %v1074, 0
        %v1139 = vsel %vm1110, %v1075, 0
        %v1142 = vsel %vm1110, %v1076, 0
        %v1145 = vsel %vm1110, %v1077, 0
        %v1148 = vsel %vm1110, %v1078, 0
        %v1151 = vsel %vm1110, %v1079, 0
        %v1154 = vsel %vm1110, %v1080, 0
        %v1157 = vsel %vm1110, %v1081, 0
        %v1160 = vsel %vm1110, %v1082, 0
        %v1163 = vsel %vm1110, %v1083, 0
        %v1166 = vsel %vm1110, %v1084, 0
        %v1169 = vsel %vm1110, %v1085, 0
        %v1172 = vsel %vm1110, %v1086, 0
        %v1175 = vsel %vm1110, %v1087, 0
        %v1178 = vsel %vm1110, %v1088, 0
        %v1181 = vsel %vm1110, %v1089, 0
        %v1184 = vsel %vm1110, %v1090, 0
        %v1187 = vsel %vm1110, %v1091, 0
        %v1190 = vsel %vm1110, %v1092, 0
        %v1193 = vsel %vm1110, %v1093, 0
        %v1196 = vsel %vm1110, %v1094, 0
        %v1199 = vsel %vm1110, %v1095, 0
        %v1202 = vsel %vm1110, %v1096, 0
        %v1205 = vsel %vm1110, %v1097, 0
        %1207 = vmatpush.msra.mxu0 0.0
        %1208 = vmatpush.msra.mxu0 0.0
        %1209 = vmatpush.msra.mxu0 0.0
        %1210 = vmatpush.msra.mxu0 0.0
        %1211 = vmatpush.msra.mxu0 0.0
        %1212 = vmatpush.msra.mxu0 0.0
        %1213 = vmatpush.msra.mxu0 0.0
        %1214 = vmatpush.msra.mxu0 0.0
        %1215 = vmatpush.msra.mxu0 %v1105
        %1216 = vmatpush.msra.mxu0 %v1104
        %1217 = vmatpush.msra.mxu0 %v1103
        %1218 = vmatpush.msra.mxu0 %v1102
        %1219 = vmatpush.msra.mxu0 %v1101
        %1220 = vmatpush.msra.mxu0 %v1100
        %1221 = vmatpush.msra.mxu0 %v1099
        %1222 = vmatpush.msra.mxu0 %v1098
        %1223 = vmatmul.f32.gmra.mxu0 %v1112
        %v1224 = vpop.f32.mrf.mxu0
        %v1225 = vadd.f32 %v1108, %v1224
        %1226 = vmatmul.f32.gmra.mxu0 %v1115
        %v1227 = vpop.f32.mrf.mxu0
        %v1228 = vadd.f32 %v1108, %v1227
        %1229 = vmatmul.f32.gmra.mxu0 %v1118
        %v1230 = vpop.f32.mrf.mxu0
        %v1231 = vadd.f32 %v1108, %v1230
        %1232 = vmatmul.f32.gmra.mxu0 %v1121
        %v1233 = vpop.f32.mrf.mxu0
        %v1234 = vadd.f32 %v1108, %v1233
        %1235 = vmatmul.f32.gmra.mxu0 %v1124
        %v1236 = vpop.f32.mrf.mxu0
        %v1237 = vadd.f32 %v1108, %v1236
        %1238 = vmatmul.f32.gmra.mxu0 %v1127
        %v1239 = vpop.f32.mrf.mxu0
        %v1240 = vadd.f32 %v1108, %v1239
        %1241 = vmatmul.f32.gmra.mxu0 %v1130
        %v1242 = vpop.f32.mrf.mxu0
        %v1243 = vadd.f32 %v1108, %v1242
        %1244 = vmatmul.f32.gmra.mxu0 %v1133
        %v1245 = vpop.f32.mrf.mxu0
        %v1246 = vadd.f32 %v1108, %v1245
        %1247 = vmatmul.f32.gmra.mxu0 %v1136
        %v1248 = vpop.f32.mrf.mxu0
        %v1249 = vadd.f32 %v1108, %v1248
        %1250 = vmatmul.f32.gmra.mxu0 %v1139
        %v1251 = vpop.f32.mrf.mxu0
        %v1252 = vadd.f32 %v1108, %v1251
        %1253 = vmatmul.f32.gmra.mxu0 %v1142
        %v1254 = vpop.f32.mrf.mxu0
        %v1255 = vadd.f32 %v1108, %v1254
        %1256 = vmatmul.f32.gmra.mxu0 %v1145
        %v1257 = vpop.f32.mrf.mxu0
        %v1258 = vadd.f32 %v1108, %v1257
        %1259 = vmatmul.f32.gmra.mxu0 %v1148
        %v1260 = vpop.f32.mrf.mxu0
        %v1261 = vadd.f32 %v1108, %v1260
        %1262 = vmatmul.f32.gmra.mxu0 %v1151
        %v1263 = vpop.f32.mrf.mxu0
        %v1264 = vadd.f32 %v1108, %v1263
        %1265 = vmatmul.f32.gmra.mxu0 %v1154
        %v1266 = vpop.f32.mrf.mxu0
        %v1267 = vadd.f32 %v1108, %v1266
        %1268 = vmatmul.f32.gmra.mxu0 %v1157
        %v1269 = vpop.f32.mrf.mxu0
        %v1270 = vadd.f32 %v1108, %v1269
        %1271 = vmatmul.f32.gmra.mxu0 %v1160
        %v1272 = vpop.f32.mrf.mxu0
        %v1273 = vadd.f32 %v1108, %v1272
        %1274 = vmatmul.f32.gmra.mxu0 %v1163
        %v1275 = vpop.f32.mrf.mxu0
        %v1276 = vadd.f32 %v1108, %v1275
        %1277 = vmatmul.f32.gmra.mxu0 %v1166
        %v1278 = vpop.f32.mrf.mxu0
        %v1279 = vadd.f32 %v1108, %v1278
        %1280 = vmatmul.f32.gmra.mxu0 %v1169
        %v1281 = vpop.f32.mrf.mxu0
        %v1282 = vadd.f32 %v1108, %v1281
        %1283 = vmatmul.f32.gmra.mxu0 %v1172
        %v1284 = vpop.f32.mrf.mxu0
        %v1285 = vadd.f32 %v1108, %v1284
        %1286 = vmatmul.f32.gmra.mxu0 %v1175
        %v1287 = vpop.f32.mrf.mxu0
        %v1288 = vadd.f32 %v1108, %v1287
        %1289 = vmatmul.f32.gmra.mxu0 %v1178
        %v1290 = vpop.f32.mrf.mxu0
        %v1291 = vadd.f32 %v1108, %v1290
        %1292 = vmatmul.f32.gmra.mxu0 %v1181
        %v1293 = vpop.f32.mrf.mxu0
        %v1294 = vadd.f32 %v1108, %v1293
        %1295 = vmatmul.f32.gmra.mxu0 %v1184
        %v1296 = vpop.f32.mrf.mxu0
        %v1297 = vadd.f32 %v1108, %v1296
        %1298 = vmatmul.f32.gmra.mxu0 %v1187
        %v1299 = vpop.f32.mrf.mxu0
        %v1300 = vadd.f32 %v1108, %v1299
        %1301 = vmatmul.f32.gmra.mxu0 %v1190
        %v1302 = vpop.f32.mrf.mxu0
        %v1303 = vadd.f32 %v1108, %v1302
        %1304 = vmatmul.f32.gmra.mxu0 %v1193
        %v1305 = vpop.f32.mrf.mxu0
        %v1306 = vadd.f32 %v1108, %v1305
        %1307 = vmatmul.f32.gmra.mxu0 %v1196
        %v1308 = vpop.f32.mrf.mxu0
        %v1309 = vadd.f32 %v1108, %v1308
        %1310 = vmatmul.f32.gmra.mxu0 %v1199
        %v1311 = vpop.f32.mrf.mxu0
        %v1312 = vadd.f32 %v1108, %v1311
        %1313 = vmatmul.f32.gmra.mxu0 %v1202
        %v1314 = vpop.f32.mrf.mxu0
        %v1315 = vadd.f32 %v1108, %v1314
        %1316 = vmatmul.f32.gmra.mxu0 %v1205
        %v1317 = vpop.f32.mrf.mxu0
        %v1318 = vadd.f32 %v1108, %v1317
        %1319 = vdwg.mxu0
        %vm1320 = vcmask 261120
        %1321 = vst.msk [vmem:[%s226] sm:$0xff] %vm1320, %v1225
        %1322 = vst.msk [vmem:[%s226 + $0x8] sm:$0xff] %vm1320, %v1228
        %1323 = vst.msk [vmem:[%s226 + $0x10] sm:$0xff] %vm1320, %v1231
        %1324 = vst.msk [vmem:[%s226 + $0x18] sm:$0xff] %vm1320, %v1234
        %1325 = vst.msk [vmem:[%s226 + $0x20] sm:$0xff] %vm1320, %v1237
        %1326 = vst.msk [vmem:[%s226 + $0x28] sm:$0xff] %vm1320, %v1240
        %1327 = vst.msk [vmem:[%s226 + $0x30] sm:$0xff] %vm1320, %v1243
        %1328 = vst.msk [vmem:[%s226 + $0x38] sm:$0xff] %vm1320, %v1246
        %1329 = vst.msk [vmem:[%s226 + $0x40] sm:$0xff] %vm1320, %v1249
        %1330 = vst.msk [vmem:[%s226 + $0x48] sm:$0xff] %vm1320, %v1252
        %1331 = vst.msk [vmem:[%s226 + $0x50] sm:$0xff] %vm1320, %v1255
        %1332 = vst.msk [vmem:[%s226 + $0x58] sm:$0xff] %vm1320, %v1258
        %1333 = vst.msk [vmem:[%s226 + $0x60] sm:$0xff] %vm1320, %v1261
        %1334 = vst.msk [vmem:[%s226 + $0x68] sm:$0xff] %vm1320, %v1264
        %1335 = vst.msk [vmem:[%s226 + $0x70] sm:$0xff] %vm1320, %v1267
        %1336 = vst.msk [vmem:[%s226 + $0x78] sm:$0xff] %vm1320, %v1270
        %1337 = vst.msk [vmem:[%s226 + $0x80] sm:$0xff] %vm1320, %v1273
        %1338 = vst.msk [vmem:[%s226 + $0x88] sm:$0xff] %vm1320, %v1276
        %1339 = vst.msk [vmem:[%s226 + $0x90] sm:$0xff] %vm1320, %v1279
        %1340 = vst.msk [vmem:[%s226 + $0x98] sm:$0xff] %vm1320, %v1282
        %1341 = vst.msk [vmem:[%s226 + $0xa0] sm:$0xff] %vm1320, %v1285
        %1342 = vst.msk [vmem:[%s226 + $0xa8] sm:$0xff] %vm1320, %v1288
        %1343 = vst.msk [vmem:[%s226 + $0xb0] sm:$0xff] %vm1320, %v1291
        %1344 = vst.msk [vmem:[%s226 + $0xb8] sm:$0xff] %vm1320, %v1294
        %1345 = vst.msk [vmem:[%s226 + $0xc0] sm:$0xff] %vm1320, %v1297
        %1346 = vst.msk [vmem:[%s226 + $0xc8] sm:$0xff] %vm1320, %v1300
        %1347 = vst.msk [vmem:[%s226 + $0xd0] sm:$0xff] %vm1320, %v1303
        %1348 = vst.msk [vmem:[%s226 + $0xd8] sm:$0xff] %vm1320, %v1306
        %1349 = vst.msk [vmem:[%s226 + $0xe0] sm:$0xff] %vm1320, %v1309
        %1350 = vst.msk [vmem:[%s226 + $0xe8] sm:$0xff] %vm1320, %v1312
        %1351 = vst.msk [vmem:[%s226 + $0xf0] sm:$0xff] %vm1320, %v1315
        %1352 = vst.msk [vmem:[%s226 + $0xf8] sm:$0xff] %vm1320, %v1318
        %s1353 = sand.u32 %s134, 1
        %s1354 = sand.u32 %s134, 1
        %s1355 = smul.addr %s1354, 256
        %s1356 = scalar_lea.vmem [#allocation2], %s1355
        // Predicated region
        $region41: #{tpu_custom_call.1} parent=39 // pred_check
          %p1357 = pneg %p144
        $region42: #{tpu_custom_call.1} parent=39 // pred_check_branch
          %1359 = sbr.rel (%p1357) target = $region44
        $region43: #{tpu_custom_call.1} parent=39 // pred_region
          %s1360 = smul.u32 32, %s16
          %s1361 = ssub.s32 125, %s1360
          %p1362 = scmp.lt.s32.totalorder %s1361, 32
          %s1363 = scalar_select %p1362, %s1361, 32
          %s1364 = smul.u32 8, %s1363
          %p1365 = scmp.ne.s32.totalorder 0, %s1364
          %s1366 = smul.addr %s1360, 8
          %s1367 = scalar_lea.vmem %s5, %s1366
          // Predicated region
          $region45: #{tpu_custom_call.1} parent=43 // pred_check
            %p1368 = pneg %p1365
          $region46: #{tpu_custom_call.1} parent=43 // pred_check_branch
            %1370 = sbr.rel (%p1368) target = $region48
          $region47: #{tpu_custom_call.1} parent=43 // pred_region
            // Predicated region
            $region49: #{tpu_custom_call.1} parent=47 // pred_check
              _
            $region50: #{tpu_custom_call.1} parent=47 // pred_check_branch
              %1372 = sbr.rel (0) target = $region52
            $region51: #{tpu_custom_call.1} parent=47 // pred_region
              // Predicated region
              $region71: #{tpu_custom_call.1} parent=51 // pred_check
                _
              $region72: #{tpu_custom_call.1} parent=51 // pred_check_branch
                %1484 = sbr.rel (0) target = $region74
              $region73: #{tpu_custom_call.1} parent=51 // pred_region
                %s1485 = sshrl.u32 %s1363, 5
                // While loop
                $region75: #{tpu_custom_call.1} parent=73 // loop_pre_header
                  _
                $region76: #{tpu_custom_call.1} parent=73 // loop_header
                  %s1487 = sphi 0, %s1489
                  %p1488 = scmp.ge.s32.totalorder %s1487, %s1485
                  %s1492 = sphi 0, %s1561
                  %s1493 = sphi %s1356, %s1564
                  %s1494 = sphi %s1367, %s1565
                $region77: #{tpu_custom_call.1} parent=73 // loop_header_branch
                  %1491 = sbr.rel (%p1488) target = $region81
                $region78: #{tpu_custom_call.1} parent=73 // loop_body
                  %v1495 = vld [vmem:[%s1493] sm:$0xff]
                  %1496 = vst [vmem:[%s1494] sm:$0xff] %v1495
                  %v1497 = vld [vmem:[%s1493 + $0x8] sm:$0xff]
                  %1498 = vst [vmem:[%s1494 + $0x8] sm:$0xff] %v1497
                  %v1499 = vld [vmem:[%s1493 + $0x10] sm:$0xff]
                  %1500 = vst [vmem:[%s1494 + $0x10] sm:$0xff] %v1499
                  %v1501 = vld [vmem:[%s1493 + $0x18] sm:$0xff]
                  %1502 = vst [vmem:[%s1494 + $0x18] sm:$0xff] %v1501
                  %v1503 = vld [vmem:[%s1493 + $0x20] sm:$0xff]
                  %1504 = vst [vmem:[%s1494 + $0x20] sm:$0xff] %v1503
                  %v1505 = vld [vmem:[%s1493 + $0x28] sm:$0xff]
                  %1506 = vst [vmem:[%s1494 + $0x28] sm:$0xff] %v1505
                  %v1507 = vld [vmem:[%s1493 + $0x30] sm:$0xff]
                  %1508 = vst [vmem:[%s1494 + $0x30] sm:$0xff] %v1507
                  %v1509 = vld [vmem:[%s1493 + $0x38] sm:$0xff]
                  %1510 = vst [vmem:[%s1494 + $0x38] sm:$0xff] %v1509
                  %v1511 = vld [vmem:[%s1493 + $0x40] sm:$0xff]
                  %1512 = vst [vmem:[%s1494 + $0x40] sm:$0xff] %v1511
                  %v1513 = vld [vmem:[%s1493 + $0x48] sm:$0xff]
                  %1514 = vst [vmem:[%s1494 + $0x48] sm:$0xff] %v1513
                  %v1515 = vld [vmem:[%s1493 + $0x50] sm:$0xff]
                  %1516 = vst [vmem:[%s1494 + $0x50] sm:$0xff] %v1515
                  %v1517 = vld [vmem:[%s1493 + $0x58] sm:$0xff]
                  %1518 = vst [vmem:[%s1494 + $0x58] sm:$0xff] %v1517
                  %v1519 = vld [vmem:[%s1493 + $0x60] sm:$0xff]
                  %1520 = vst [vmem:[%s1494 + $0x60] sm:$0xff] %v1519
                  %v1521 = vld [vmem:[%s1493 + $0x68] sm:$0xff]
                  %1522 = vst [vmem:[%s1494 + $0x68] sm:$0xff] %v1521
                  %v1523 = vld [vmem:[%s1493 + $0x70] sm:$0xff]
                  %1524 = vst [vmem:[%s1494 + $0x70] sm:$0xff] %v1523
                  %v1525 = vld [vmem:[%s1493 + $0x78] sm:$0xff]
                  %1526 = vst [vmem:[%s1494 + $0x78] sm:$0xff] %v1525
                  %v1527 = vld [vmem:[%s1493 + $0x80] sm:$0xff]
                  %1528 = vst [vmem:[%s1494 + $0x80] sm:$0xff] %v1527
                  %v1529 = vld [vmem:[%s1493 + $0x88] sm:$0xff]
                  %1530 = vst [vmem:[%s1494 + $0x88] sm:$0xff] %v1529
                  %v1531 = vld [vmem:[%s1493 + $0x90] sm:$0xff]
                  %1532 = vst [vmem:[%s1494 + $0x90] sm:$0xff] %v1531
                  %v1533 = vld [vmem:[%s1493 + $0x98] sm:$0xff]
                  %1534 = vst [vmem:[%s1494 + $0x98] sm:$0xff] %v1533
                  %v1535 = vld [vmem:[%s1493 + $0xa0] sm:$0xff]
                  %1536 = vst [vmem:[%s1494 + $0xa0] sm:$0xff] %v1535
                  %v1537 = vld [vmem:[%s1493 + $0xa8] sm:$0xff]
                  %1538 = vst [vmem:[%s1494 + $0xa8] sm:$0xff] %v1537
                  %v1539 = vld [vmem:[%s1493 + $0xb0] sm:$0xff]
                  %1540 = vst [vmem:[%s1494 + $0xb0] sm:$0xff] %v1539
                  %v1541 = vld [vmem:[%s1493 + $0xb8] sm:$0xff]
                  %1542 = vst [vmem:[%s1494 + $0xb8] sm:$0xff] %v1541
                  %v1543 = vld [vmem:[%s1493 + $0xc0] sm:$0xff]
                  %1544 = vst [vmem:[%s1494 + $0xc0] sm:$0xff] %v1543
                  %v1545 = vld [vmem:[%s1493 + $0xc8] sm:$0xff]
                  %1546 = vst [vmem:[%s1494 + $0xc8] sm:$0xff] %v1545
                  %v1547 = vld [vmem:[%s1493 + $0xd0] sm:$0xff]
                  %1548 = vst [vmem:[%s1494 + $0xd0] sm:$0xff] %v1547
                  %v1549 = vld [vmem:[%s1493 + $0xd8] sm:$0xff]
                  %1550 = vst [vmem:[%s1494 + $0xd8] sm:$0xff] %v1549
                  %v1551 = vld [vmem:[%s1493 + $0xe0] sm:$0xff]
                  %1552 = vst [vmem:[%s1494 + $0xe0] sm:$0xff] %v1551
                  %v1553 = vld [vmem:[%s1493 + $0xe8] sm:$0xff]
                  %1554 = vst [vmem:[%s1494 + $0xe8] sm:$0xff] %v1553
                  %v1555 = vld [vmem:[%s1493 + $0xf0] sm:$0xff]
                  %1556 = vst [vmem:[%s1494 + $0xf0] sm:$0xff] %v1555
                  %v1557 = vld [vmem:[%s1493 + $0xf8] sm:$0xff]
                  %1558 = vst [vmem:[%s1494 + $0xf8] sm:$0xff] %v1557
                  %s1559 = sadd.s32 1, %s1492
                  %p1560 = scmp.ge.s32.totalorder %s1559, %s1485
                  %s1561 = scalar_select %p1560, 0, %s1559
                  %s1562 = smul.u32 %s1561, 256
                  %s1563 = smul.u32 %s1561, 256
                  %s1564 = scalar_lea.vmem %s1356, %s1562 [#allocation2]
                  %s1565 = scalar_lea.vmem %s1367, %s1563
                $region79: #{tpu_custom_call.1} parent=73 // loop_footer
                  %s1489 = sadd.s32 %s1487, 1
                $region80: #{tpu_custom_call.1} parent=73 // loop_footer_branch
                  %1486 = sbr.rel target = $region76
                $region81: #{tpu_custom_call.1} parent=73 // loop_exit
                  _
                %s1566 = sshrl.u32 %s1363, 5
                %s1567 = sand.u32 %s1363, 31
                %s1568 = smul.u32 %s1566, 32
                %s1569 = smul.u32 8, %s1568
                %s1570 = scalar_lea.vmem %s1356, %s1569 [#allocation2]
                %s1571 = smul.u32 8, %s1568
                %s1572 = scalar_lea.vmem %s1367, %s1571
                // While loop
                $region82: #{tpu_custom_call.1} parent=73 // loop_pre_header
                  _
                $region83: #{tpu_custom_call.1} parent=73 // loop_header
                  %s1574 = sphi 0, %s1576
                  %p1575 = scmp.ge.s32.totalorder %s1574, %s1567
                  %s1579 = sphi 0, %s1586
                  %s1580 = sphi %s1570, %s1589
                  %s1581 = sphi %s1572, %s1590
                $region84: #{tpu_custom_call.1} parent=73 // loop_header_branch
                  %1578 = sbr.rel (%p1575) target = $region88
                $region85: #{tpu_custom_call.1} parent=73 // loop_body
                  %v1582 = vld [vmem:[%s1580] sm:$0xff]
                  %1583 = vst [vmem:[%s1581] sm:$0xff] %v1582
                  %s1584 = sadd.s32 1, %s1579
                  %p1585 = scmp.ge.s32.totalorder %s1584, %s1567
                  %s1586 = scalar_select %p1585, 0, %s1584
                  %s1587 = smul.u32 %s1586, 8
                  %s1588 = smul.u32 %s1586, 8
                  %s1589 = scalar_lea.vmem %s1570, %s1587 [#allocation2]
                  %s1590 = scalar_lea.vmem %s1572, %s1588
                $region86: #{tpu_custom_call.1} parent=73 // loop_footer
                  %s1576 = sadd.s32 %s1574, 1
                $region87: #{tpu_custom_call.1} parent=73 // loop_footer_branch
                  %1573 = sbr.rel target = $region83
                $region88: #{tpu_custom_call.1} parent=73 // loop_exit
                  _
              $region74: #{tpu_custom_call.1} parent=51 // pred_fallthru
                _
              // Predicated region
              $region89: #{tpu_custom_call.1} parent=51 // pred_check
                _
              $region90: #{tpu_custom_call.1} parent=51 // pred_check_branch
                %1592 = sbr.rel target = $region92
              $region91: #{tpu_custom_call.1} parent=51 // pred_region
                _
              $region92: #{tpu_custom_call.1} parent=51 // pred_fallthru
                _
            $region52: #{tpu_custom_call.1} parent=47 // pred_fallthru
              _
            // Predicated region
            $region53: #{tpu_custom_call.1} parent=47 // pred_check
              _
            $region54: #{tpu_custom_call.1} parent=47 // pred_check_branch
              %1374 = sbr.rel target = $region56
            $region55: #{tpu_custom_call.1} parent=47 // pred_region
              %s1376 = ssub.s32 256, 1
              %s1377 = sshrl.u32 %s1363, 5
              // While loop
              $region57: #{tpu_custom_call.1} parent=55 // loop_pre_header
                _
              $region58: #{tpu_custom_call.1} parent=55 // loop_header
                %s1379 = sphi 0, %s1381
                %p1380 = scmp.ge.s32.totalorder %s1379, %s1377
                %s1384 = sphi 0, %s1453
                %s1385 = sphi %s1356, %s1456
                %s1386 = sphi %s1367, %s1457
              $region59: #{tpu_custom_call.1} parent=55 // loop_header_branch
                %1383 = sbr.rel (%p1380) target = $region63
              $region60: #{tpu_custom_call.1} parent=55 // loop_body
                %v1387 = vld [vmem:[%s1385] sm:%s1376]
                %1388 = vst [vmem:[%s1386] sm:%s1376] %v1387
                %v1389 = vld [vmem:[%s1385 + $0x8] sm:%s1376]
                %1390 = vst [vmem:[%s1386 + $0x8] sm:%s1376] %v1389
                %v1391 = vld [vmem:[%s1385 + $0x10] sm:%s1376]
                %1392 = vst [vmem:[%s1386 + $0x10] sm:%s1376] %v1391
                %v1393 = vld [vmem:[%s1385 + $0x18] sm:%s1376]
                %1394 = vst [vmem:[%s1386 + $0x18] sm:%s1376] %v1393
                %v1395 = vld [vmem:[%s1385 + $0x20] sm:%s1376]
                %1396 = vst [vmem:[%s1386 + $0x20] sm:%s1376] %v1395
                %v1397 = vld [vmem:[%s1385 + $0x28] sm:%s1376]
                %1398 = vst [vmem:[%s1386 + $0x28] sm:%s1376] %v1397
                %v1399 = vld [vmem:[%s1385 + $0x30] sm:%s1376]
                %1400 = vst [vmem:[%s1386 + $0x30] sm:%s1376] %v1399
                %v1401 = vld [vmem:[%s1385 + $0x38] sm:%s1376]
                %1402 = vst [vmem:[%s1386 + $0x38] sm:%s1376] %v1401
                %v1403 = vld [vmem:[%s1385 + $0x40] sm:%s1376]
                %1404 = vst [vmem:[%s1386 + $0x40] sm:%s1376] %v1403
                %v1405 = vld [vmem:[%s1385 + $0x48] sm:%s1376]
                %1406 = vst [vmem:[%s1386 + $0x48] sm:%s1376] %v1405
                %v1407 = vld [vmem:[%s1385 + $0x50] sm:%s1376]
                %1408 = vst [vmem:[%s1386 + $0x50] sm:%s1376] %v1407
                %v1409 = vld [vmem:[%s1385 + $0x58] sm:%s1376]
                %1410 = vst [vmem:[%s1386 + $0x58] sm:%s1376] %v1409
                %v1411 = vld [vmem:[%s1385 + $0x60] sm:%s1376]
                %1412 = vst [vmem:[%s1386 + $0x60] sm:%s1376] %v1411
                %v1413 = vld [vmem:[%s1385 + $0x68] sm:%s1376]
                %1414 = vst [vmem:[%s1386 + $0x68] sm:%s1376] %v1413
                %v1415 = vld [vmem:[%s1385 + $0x70] sm:%s1376]
                %1416 = vst [vmem:[%s1386 + $0x70] sm:%s1376] %v1415
                %v1417 = vld [vmem:[%s1385 + $0x78] sm:%s1376]
                %1418 = vst [vmem:[%s1386 + $0x78] sm:%s1376] %v1417
                %v1419 = vld [vmem:[%s1385 + $0x80] sm:%s1376]
                %1420 = vst [vmem:[%s1386 + $0x80] sm:%s1376] %v1419
                %v1421 = vld [vmem:[%s1385 + $0x88] sm:%s1376]
                %1422 = vst [vmem:[%s1386 + $0x88] sm:%s1376] %v1421
                %v1423 = vld [vmem:[%s1385 + $0x90] sm:%s1376]
                %1424 = vst [vmem:[%s1386 + $0x90] sm:%s1376] %v1423
                %v1425 = vld [vmem:[%s1385 + $0x98] sm:%s1376]
                %1426 = vst [vmem:[%s1386 + $0x98] sm:%s1376] %v1425
                %v1427 = vld [vmem:[%s1385 + $0xa0] sm:%s1376]
                %1428 = vst [vmem:[%s1386 + $0xa0] sm:%s1376] %v1427
                %v1429 = vld [vmem:[%s1385 + $0xa8] sm:%s1376]
                %1430 = vst [vmem:[%s1386 + $0xa8] sm:%s1376] %v1429
                %v1431 = vld [vmem:[%s1385 + $0xb0] sm:%s1376]
                %1432 = vst [vmem:[%s1386 + $0xb0] sm:%s1376] %v1431
                %v1433 = vld [vmem:[%s1385 + $0xb8] sm:%s1376]
                %1434 = vst [vmem:[%s1386 + $0xb8] sm:%s1376] %v1433
                %v1435 = vld [vmem:[%s1385 + $0xc0] sm:%s1376]
                %1436 = vst [vmem:[%s1386 + $0xc0] sm:%s1376] %v1435
                %v1437 = vld [vmem:[%s1385 + $0xc8] sm:%s1376]
                %1438 = vst [vmem:[%s1386 + $0xc8] sm:%s1376] %v1437
                %v1439 = vld [vmem:[%s1385 + $0xd0] sm:%s1376]
                %1440 = vst [vmem:[%s1386 + $0xd0] sm:%s1376] %v1439
                %v1441 = vld [vmem:[%s1385 + $0xd8] sm:%s1376]
                %1442 = vst [vmem:[%s1386 + $0xd8] sm:%s1376] %v1441
                %v1443 = vld [vmem:[%s1385 + $0xe0] sm:%s1376]
                %1444 = vst [vmem:[%s1386 + $0xe0] sm:%s1376] %v1443
                %v1445 = vld [vmem:[%s1385 + $0xe8] sm:%s1376]
                %1446 = vst [vmem:[%s1386 + $0xe8] sm:%s1376] %v1445
                %v1447 = vld [vmem:[%s1385 + $0xf0] sm:%s1376]
                %1448 = vst [vmem:[%s1386 + $0xf0] sm:%s1376] %v1447
                %v1449 = vld [vmem:[%s1385 + $0xf8] sm:%s1376]
                %1450 = vst [vmem:[%s1386 + $0xf8] sm:%s1376] %v1449
                %s1451 = sadd.s32 1, %s1384
                %p1452 = scmp.ge.s32.totalorder %s1451, %s1377
                %s1453 = scalar_select %p1452, 0, %s1451
                %s1454 = smul.u32 %s1453, 256
                %s1455 = smul.u32 %s1453, 256
                %s1456 = scalar_lea.vmem %s1356, %s1454 [#allocation2]
                %s1457 = scalar_lea.vmem %s1367, %s1455
              $region61: #{tpu_custom_call.1} parent=55 // loop_footer
                %s1381 = sadd.s32 %s1379, 1
              $region62: #{tpu_custom_call.1} parent=55 // loop_footer_branch
                %1378 = sbr.rel target = $region58
              $region63: #{tpu_custom_call.1} parent=55 // loop_exit
                _
              %s1458 = sshrl.u32 %s1363, 5
              %s1459 = sand.u32 %s1363, 31
              %s1460 = smul.u32 %s1458, 32
              %s1461 = smul.u32 8, %s1460
              %s1462 = scalar_lea.vmem %s1356, %s1461 [#allocation2]
              %s1463 = smul.u32 8, %s1460
              %s1464 = scalar_lea.vmem %s1367, %s1463
              // While loop
              $region64: #{tpu_custom_call.1} parent=55 // loop_pre_header
                _
              $region65: #{tpu_custom_call.1} parent=55 // loop_header
                %s1466 = sphi 0, %s1468
                %p1467 = scmp.ge.s32.totalorder %s1466, %s1459
                %s1471 = sphi 0, %s1478
                %s1472 = sphi %s1462, %s1481
                %s1473 = sphi %s1464, %s1482
              $region66: #{tpu_custom_call.1} parent=55 // loop_header_branch
                %1470 = sbr.rel (%p1467) target = $region70
              $region67: #{tpu_custom_call.1} parent=55 // loop_body
                %v1474 = vld [vmem:[%s1472] sm:%s1376]
                %1475 = vst [vmem:[%s1473] sm:%s1376] %v1474
                %s1476 = sadd.s32 1, %s1471
                %p1477 = scmp.ge.s32.totalorder %s1476, %s1459
                %s1478 = scalar_select %p1477, 0, %s1476
                %s1479 = smul.u32 %s1478, 8
                %s1480 = smul.u32 %s1478, 8
                %s1481 = scalar_lea.vmem %s1462, %s1479 [#allocation2]
                %s1482 = scalar_lea.vmem %s1464, %s1480
              $region68: #{tpu_custom_call.1} parent=55 // loop_footer
                %s1468 = sadd.s32 %s1466, 1
              $region69: #{tpu_custom_call.1} parent=55 // loop_footer_branch
                %1465 = sbr.rel target = $region65
              $region70: #{tpu_custom_call.1} parent=55 // loop_exit
                _
            $region56: #{tpu_custom_call.1} parent=47 // pred_fallthru
              _
          $region48: #{tpu_custom_call.1} parent=43 // pred_fallthru
            _
          %1593 = vnop
        $region44: #{tpu_custom_call.1} parent=39 // pred_fallthru
          _
      $region40: #{tpu_custom_call.1} parent=5 // pred_fallthru
        _
      %p1594 = scmp.le.s32.totalorder 2, %s11
      // Predicated region
      $region93: #{tpu_custom_call.1} parent=5 // pred_check
        %p1595 = pneg %p1594
      $region94: #{tpu_custom_call.1} parent=5 // pred_check_branch
        %1597 = sbr.rel (%p1595) target = $region96
      $region95: #{tpu_custom_call.1} parent=5 // pred_region
        %s1598 = ssub.s32 %s11, 2
        // Predicated region
        $region97: #{tpu_custom_call.1} parent=95 // pred_check
          %p1599 = pneg %p150
        $region98: #{tpu_custom_call.1} parent=95 // pred_check_branch
          %1601 = sbr.rel (%p1599) target = $region100
        $region99: #{tpu_custom_call.1} parent=95 // pred_region
          %s1602 = sand.u32 %s135, 1
          %s1603 = sand.u32 %s135, 1
          %s1604 = smul.addr %s1603, 256
          %s1605 = scalar_lea.vmem [#allocation2], %s1604
        $region100: #{tpu_custom_call.1} parent=95 // pred_fallthru
          _
      $region96: #{tpu_custom_call.1} parent=5 // pred_fallthru
        _
    $region6: #{tpu_custom_call.1} parent=1 // loop_footer
      %s15 = sadd.s32 1, %s11
    $region7: #{tpu_custom_call.1} parent=1 // loop_footer_branch
      %10 = sbr.rel target = $region3
    $region8: #{tpu_custom_call.1} parent=1 // loop_exit
      _

</llo_original>
